<compile_context>
chip_gen: v5e
topology: v5e:2x2
jax: 0.10.0
libtpu: 0.0.40
codegen_flags: <defaults>
</compile_context>

<pallas_src>
import functools

import jax
import jax.numpy as jnp
from jax import lax
from jax.experimental import pallas as pl
from jax.experimental.pallas import tpu as pltpu


def _grvq_kernel(x_ref, ekd_ref, edk_ref, ehalf_ref,     # inputs
                 q_ref, sse_ref, cnt_ref,                 # outputs
                 *, num_residual, tile_hw, hw_valid, apply_mask):
    """Residual VQ for all groups of one (batch, token-tile) grid step.

    x_ref:     [1, G, Dg, T]   input tile (tokens on lanes)
    ekd_ref:   [R, G, K, Dg]   codebooks, [K, Dg] orientation (distance matmul)
    edk_ref:   [R, G, Dg, K]   codebooks, [Dg, K] orientation (gather matmul)
    ehalf_ref: [R, G, K, 1]    precomputed 0.5 * ||e||^2 per code
    q_ref:     [1, G, Dg, T]   summed quantized output tile
    sse_ref:   [1, 1, G, 1, R] per-tile partial sum of squared error
    cnt_ref:   [1, 1, G, K, R] per-tile partial code counts
    """
    R = num_residual
    K = ekd_ref.shape[2]
    T = tile_hw

    residual = x_ref[0]                          # [G, Dg, T]
    quant = jnp.zeros_like(residual)

    # float iota over the code (sublane) axis; shared by all residual levels
    iota_k = lax.broadcasted_iota(jnp.int32, (1, K, T), 1).astype(jnp.float32)

    if apply_mask:
        # lane mask for the out-of-bounds tail of a partial last tile
        n = pl.program_id(1)
        col = n * T + lax.broadcasted_iota(jnp.int32, (1, 1, T), 2)
        valid = col < hw_valid                   # bool [1, 1, T]
        validf = valid.astype(jnp.float32)

    sse_cols = []
    cnt_cols = []
    for r in range(R):                           # R is small -> static unroll
        e_kd = ekd_ref[r]                        # [G, K, Dg]
        e_dk = edk_ref[r]                        # [G, Dg, K]
        e_h = ehalf_ref[r]                       # [G, K, 1]

        # argmax(e.x - 0.5||e||^2) == argmin(||e - x||^2)  (||x||^2 is
        # constant per token); one batched MXU matmul over all groups.
        cross = jnp.einsum('gkd,gdt->gkt', e_kd, residual,
                           preferred_element_type=jnp.float32)       # [G,K,T]
        score = cross - e_h                                          # [G,K,T]

        # first-index argmax over the code axis (matches torch tie-breaking)
        best = jnp.max(score, axis=1, keepdims=True)                 # [G,1,T]
        idx = jnp.min(jnp.where(score >= best, iota_k, jnp.float32(K)),
                      axis=1, keepdims=True)                         # [G,1,T]
        enc = (iota_k == idx).astype(jnp.float32)                    # [G,K,T]
        if apply_mask:
            enc = enc * validf                   # zero out padded tokens

        q = jnp.einsum('gdk,gkt->gdt', e_dk, enc,
                       preferred_element_type=jnp.float32)           # [G,Dg,T]
        diff = q - residual

        row = jnp.sum(diff * diff, axis=1, keepdims=True)            # [G,1,T]
        if apply_mask:
            row = jnp.where(valid, row, 0.0)
        sse_cols.append(jnp.sum(row, axis=2, keepdims=True))         # [G,1,1]
        cnt_cols.append(jnp.sum(enc, axis=2, keepdims=True))         # [G,K,1]

        quant = quant + q
        residual = residual - q                  # detached residual update

    q_ref[0] = quant
    sse_ref[0, 0] = jnp.concatenate(sse_cols, axis=2)                # [G,1,R]
    cnt_ref[0, 0] = jnp.concatenate(cnt_cols, axis=2)                # [G,K,R]


def grouped_residual_vq(x, embeddings, *, num_groups, num_residual,
                        commitment_cost, num_embeddings, tile_hw=None):
    """Eval-mode forward of GroupedResidualVQ.

    Returns (loss, quantized, perplexity, encodings) like the PyTorch module.
    `x` is NCHW (or NCL); `embeddings` is [G, R, K, Dg].
    """
    orig_ndim = x.ndim
    if orig_ndim == 3:                      # (B, D, L) -> (B, D, L, 1)
        x = x[..., None]
    B, D, H, W = x.shape
    G, R = num_groups, num_residual
    Dg = D // G
    K = embeddings.shape[2]
    HW = H * W
    N = B * HW

    # --- token tile size: K/G-aware, sized for ~16 MiB of live VMEM ---------
    if tile_hw is None:
        per_tok = 4 * (3 * G * K + 10 * D)        # rough live bytes per token
        budget = 16 * 1024 * 1024
        tile_hw = max(128, min(16384, (budget // per_tok) // 128 * 128))
    if HW <= tile_hw:
        tile_hw = HW                              # single full tile
    else:
        tile_hw = max(128, (int(tile_hw) // 128) * 128)
    n_hw = pl.cdiv(HW, tile_hw)
    apply_mask = (HW % tile_hw) != 0              # partial last block

    # free view of NCHW: channels are already group-major -> no HBM transpose
    x_g = x.astype(jnp.float32).reshape(B, G, Dg, HW)

    emb = embeddings.astype(jnp.float32)                      # [G, R, K, Dg]
    e_kd = jnp.transpose(emb, (1, 0, 2, 3))                   # [R, G, K, Dg]
    e_dk = jnp.transpose(emb, (1, 0, 3, 2))                   # [R, G, Dg, K]
    e_half = 0.5 * jnp.sum(emb * emb, axis=-1)                # [G, R, K]
    e_half = jnp.transpose(e_half, (1, 0, 2))[..., None]      # [R, G, K, 1]

    kernel = functools.partial(_grvq_kernel, num_residual=R, tile_hw=tile_hw,
                               hw_valid=HW, apply_mask=apply_mask)

    q_g, sse_part, cnt_part = pl.pallas_call(
        kernel,
        out_shape=(
            jax.ShapeDtypeStruct((B, G, Dg, HW), jnp.float32),
            jax.ShapeDtypeStruct((B, n_hw, G, 1, R), jnp.float32),
            jax.ShapeDtypeStruct((B, n_hw, G, K, R), jnp.float32),
        ),
        grid_spec=pltpu.PrefetchScalarGridSpec(
            num_scalar_prefetch=0,
            grid=(B, n_hw),
            in_specs=[
                pl.BlockSpec((1, G, Dg, tile_hw), lambda b, n: (b, 0, 0, n)),
                pl.BlockSpec((R, G, K, Dg), lambda b, n: (0, 0, 0, 0)),
                pl.BlockSpec((R, G, Dg, K), lambda b, n: (0, 0, 0, 0)),
                pl.BlockSpec((R, G, K, 1), lambda b, n: (0, 0, 0, 0)),
            ],
            out_specs=[
                pl.BlockSpec((1, G, Dg, tile_hw), lambda b, n: (b, 0, 0, n)),
                pl.BlockSpec((1, 1, G, 1, R), lambda b, n: (b, n, 0, 0, 0)),
                pl.BlockSpec((1, 1, G, K, R), lambda b, n: (b, n, 0, 0, 0)),
            ],
        ),
        compiler_params=pltpu.CompilerParams(
            dimension_semantics=("parallel", "parallel"),
            vmem_limit_bytes=40 * 1024 * 1024,
        ),
    )(x_g, e_kd, e_dk, e_half)

    # tiny scalar glue over the per-tile partial statistics
    sse = jnp.sum(sse_part, axis=(0, 1))[:, 0, :]                       # [G, R]
    counts = jnp.transpose(jnp.sum(cnt_part, axis=(0, 1)), (0, 2, 1))   # [G, R, K]

    per_q_loss = commitment_cost * (sse / (N * Dg))                     # [G, R]
    loss = jnp.mean(per_q_loss)
    probs = counts / N                                                  # [G, R, K]
    per_q_perp = jnp.exp(-jnp.sum(probs * jnp.log(probs + 1e-10), axis=-1))
    perplexity = jnp.mean(per_q_perp)

    # [B, G, Dg, HW] -> NCHW is a free reshape (channels are group-major)
    quantized = q_g.reshape(B, D, H, W)
    if orig_ndim == 3:
        quantized = quantized.reshape(B, D, H)

    # the torch module returns an all-zero encodings tensor of this shape
    encodings = jnp.zeros((N, num_embeddings), jnp.float32)
    return loss, quantized, perplexity, encodings


def _ref_forward(x_nchw, embeddings, num_groups, num_residual,
                 commitment_cost, num_embeddings):
    """Pure-JAX reference matching the PyTorch forward (eval mode)."""
    B, D, H, W = x_nchw.shape
    G, R = num_groups, num_residual
    Dg = D // G
    K = embeddings.shape[2]
    N = B * H * W
    xf = jnp.transpose(x_nchw, (0, 2, 3, 1)).reshape(N, G, Dg)
    losses, perps, q_groups = [], [], []
    for g in range(G):
        residual = xf[:, g, :]
        q_g = jnp.zeros_like(residual)
        for r in range(R):
            e = embeddings[g, r]
            d = (jnp.sum(residual ** 2, axis=1, keepdims=True)
                 + jnp.sum(e ** 2, axis=1)
                 - 2.0 * jnp.dot(residual, e.T, preferred_element_type=jnp.float32))
            idx = jnp.argmin(d, axis=1)
            q = e[idx]
            enc = jax.nn.one_hot(idx, K, dtype=jnp.float32)
            losses.append(commitment_cost * jnp.mean((q - residual) ** 2))
            p = jnp.mean(enc, axis=0)
            perps.append(jnp.exp(-jnp.sum(p * jnp.log(p + 1e-10))))
            q_g = q_g + q
            residual = residual - q
        q_groups.append(q_g)
    quantized = jnp.stack(q_groups, axis=1).reshape(N, D)
    quantized = jnp.transpose(quantized.reshape(B, H, W, D), (0, 3, 1, 2))
    loss = sum(losses) / len(losses)
    perp = sum(perps) / len(perps)
    return loss, quantized, perp


if __name__ == "__main__":
    # module config (small, consistent with GroupedResidualVQ constraints)
    num_embeddings = 64
    embedding_dim = 32
    num_groups = 4
    num_residual = 2
    commitment_cost = 0.25

    G, R = num_groups, num_residual
    Dg = embedding_dim // num_groups          # 8
    K = num_embeddings // num_groups          # 16 codes per quantizer

    key = jax.random.PRNGKey(0)
    kx, ke, kx2, kx3 = jax.random.split(key, 4)
    # input: NCHW, channels == embedding_dim
    x = jax.random.normal(kx, (2, embedding_dim, 8, 8), jnp.float32)
    # deterministic codebooks, one per (group, residual level)
    embeddings = jax.random.normal(ke, (G, R, K, Dg), jnp.float32)

    loss, quantized, perplexity, encodings = grouped_residual_vq(
        x, embeddings, num_groups=G, num_residual=R,
        commitment_cost=commitment_cost, num_embeddings=num_embeddings)
    jax.block_until_ready((loss, quantized, perplexity, encodings))

    rl, rq, rp = _ref_forward(x, embeddings, G, R, commitment_cost, num_embeddings)
    assert quantized.shape == x.shape
    assert encodings.shape == (2 * 8 * 8, num_embeddings)
    assert jnp.allclose(quantized, rq, atol=1e-4), "quantized mismatch"
    assert jnp.allclose(loss, rl, atol=1e-5), "loss mismatch"
    assert jnp.allclose(perplexity, rp, atol=1e-4), "perplexity mismatch"

    # case 2: HW = 25 (non-128-multiple lane width, single full tile)
    x2 = jax.random.normal(kx2, (2, embedding_dim, 5, 5), jnp.float32)
    l2, q2, p2, enc2 = grouped_residual_vq(
        x2, embeddings, num_groups=G, num_residual=R,
        commitment_cost=commitment_cost, num_embeddings=num_embeddings)
    jax.block_until_ready((l2, q2, p2, enc2))
    rl2, rq2, rp2 = _ref_forward(x2, embeddings, G, R, commitment_cost, num_embeddings)
    assert q2.shape == x2.shape
    assert jnp.allclose(q2, rq2, atol=1e-4), "quantized mismatch (case 2)"
    assert jnp.allclose(l2, rl2, atol=1e-5), "loss mismatch (case 2)"
    assert jnp.allclose(p2, rp2, atol=1e-4), "perplexity mismatch (case 2)"

    # case 3: HW = 144 with a forced 128-token tile -> multi-tile grid with a
    # masked partial last block (exercises the general tiling/masking path)
    x3 = jax.random.normal(kx3, (2, embedding_dim, 12, 12), jnp.float32)
    l3, q3, p3, enc3 = grouped_residual_vq(
        x3, embeddings, num_groups=G, num_residual=R,
        commitment_cost=commitment_cost, num_embeddings=num_embeddings,
        tile_hw=128)
    jax.block_until_ready((l3, q3, p3, enc3))
    rl3, rq3, rp3 = _ref_forward(x3, embeddings, G, R, commitment_cost, num_embeddings)
    assert q3.shape == x3.shape
    assert jnp.allclose(q3, rq3, atol=1e-4), "quantized mismatch (case 3)"
    assert jnp.allclose(l3, rl3, atol=1e-5), "loss mismatch (case 3)"
    assert jnp.allclose(p3, rp3, atol=1e-4), "perplexity mismatch (case 3)"

    print("KERNEL_OK")
</pallas_src>

<mosaic_0001>
module attributes {stable_mosaic.version = 11 : i64} {
  func.func @_grvq_kernel(%arg0: i32, %arg1: i32, %arg2: memref<1x4x8x64xf32, #tpu.memory_space<vmem>>, %arg3: memref<2x4x16x8xf32, #tpu.memory_space<vmem>>, %arg4: memref<2x4x8x16xf32, #tpu.memory_space<vmem>>, %arg5: memref<2x4x16x1xf32, #tpu.memory_space<vmem>>, %arg6: memref<1x4x8x64xf32, #tpu.memory_space<vmem>>, %arg7: memref<1x1x4x1x2xf32, #tpu.memory_space<vmem>>, %arg8: memref<1x1x4x16x2xf32, #tpu.memory_space<vmem>>) attributes {dimension_semantics = [#tpu.dimension_semantics<parallel>, #tpu.dimension_semantics<parallel>], iteration_bounds = array<i64: 2, 1>, scalar_prefetch = 0 : i64, scratch_operands = 0 : i64, tpu.core_type = #tpu.core_type<tc>, window_params = [{transform_indices = @transform_0, window_bounds = array<i64: 1, 4, 8, 64>}, {pipeline_mode = #tpu.pipeline_mode<synchronous>, transform_indices = @transform_1, window_bounds = array<i64: 2, 4, 16, 8>}, {pipeline_mode = #tpu.pipeline_mode<synchronous>, transform_indices = @transform_2, window_bounds = array<i64: 2, 4, 8, 16>}, {pipeline_mode = #tpu.pipeline_mode<synchronous>, transform_indices = @transform_3, window_bounds = array<i64: 2, 4, 16, 1>}, {transform_indices = @transform_4, window_bounds = array<i64: 1, 4, 8, 64>}, {transform_indices = @transform_5, window_bounds = array<i64: 1, 1, 4, 1, 2>}, {transform_indices = @transform_6, window_bounds = array<i64: 1, 1, 4, 16, 2>}]} {
    %c0 = arith.constant 0 : index
    %c0_0 = arith.constant 0 : index
    %c0_1 = arith.constant 0 : index
    %c0_2 = arith.constant 0 : index
    %0 = vector.load %arg2[%c0, %c0_0, %c0_1, %c0_2] : memref<1x4x8x64xf32, #tpu.memory_space<vmem>>, vector<1x4x8x64xf32>
    %1 = vector.shape_cast %0 : vector<1x4x8x64xf32> to vector<4x8x64xf32>
    %cst = arith.constant 0.000000e+00 : f32
    %2 = vector.broadcast %cst : f32 to vector<4x8x64xf32>
    %3 = tpu.iota {dimensions = array<i32: 1>} : vector<1x16x64xi32>
    %4 = arith.sitofp %3 : vector<1x16x64xi32> to vector<1x16x64xf32>
    %c0_3 = arith.constant 0 : index
    %c0_4 = arith.constant 0 : index
    %c0_5 = arith.constant 0 : index
    %c0_6 = arith.constant 0 : index
    %5 = vector.load %arg3[%c0_3, %c0_4, %c0_5, %c0_6] : memref<2x4x16x8xf32, #tpu.memory_space<vmem>>, vector<1x4x16x8xf32>
    %6 = vector.shape_cast %5 : vector<1x4x16x8xf32> to vector<4x16x8xf32>
    %c0_7 = arith.constant 0 : index
    %c0_8 = arith.constant 0 : index
    %c0_9 = arith.constant 0 : index
    %c0_10 = arith.constant 0 : index
    %7 = vector.load %arg4[%c0_7, %c0_8, %c0_9, %c0_10] : memref<2x4x8x16xf32, #tpu.memory_space<vmem>>, vector<1x4x8x16xf32>
    %8 = vector.shape_cast %7 : vector<1x4x8x16xf32> to vector<4x8x16xf32>
    %c0_11 = arith.constant 0 : index
    %c0_12 = arith.constant 0 : index
    %c0_13 = arith.constant 0 : index
    %c0_14 = arith.constant 0 : index
    %9 = vector.load %arg5[%c0_11, %c0_12, %c0_13, %c0_14] : memref<2x4x16x1xf32, #tpu.memory_space<vmem>>, vector<1x4x16x1xf32>
    %10 = vector.shape_cast %9 : vector<1x4x16x1xf32> to vector<4x16x1xf32>
    "tpu.trace_start"() <{level = 10 : i32, message = "gkd,gdt->gkt"}> : () -> ()
    %cst_15 = arith.constant dense<0.000000e+00> : vector<4x16x64xf32>
    %11 = tpu.matmul %6, %1, %cst_15 {dimension_numbers = #tpu.dot_dimension_numbers<[2], [1], [1], [2], [0, 0, 0, 1, 1, 2], [0], [0]>} : vector<4x16x8xf32>, vector<4x8x64xf32>, vector<4x16x64xf32> -> vector<4x16x64xf32>
    "tpu.trace_stop"() : () -> ()
    %12 = vector.broadcast %10 : vector<4x16x1xf32> to vector<4x16x64xf32>
    %13 = arith.subf %11, %12 : vector<4x16x64xf32>
    %cst_16 = arith.constant dense<0xFF800000> : vector<4x64xf32>
    %14 = vector.multi_reduction <maximumf>, %13, %cst_16 [1] : vector<4x16x64xf32> to vector<4x64xf32>
    %15 = vector.shape_cast %14 : vector<4x64xf32> to vector<4x1x64xf32>
    %16 = vector.broadcast %15 : vector<4x1x64xf32> to vector<4x16x64xf32>
    %17 = arith.cmpf oge, %13, %16 : vector<4x16x64xf32>
    %cst_17 = arith.constant 1.600000e+01 : f32
    %18 = vector.shape_cast %4 : vector<1x16x64xf32> to vector<1x16x64xf32>
    %19 = vector.broadcast %18 : vector<1x16x64xf32> to vector<4x16x64xf32>
    %20 = vector.broadcast %cst_17 : f32 to vector<4x16x64xf32>
    %21 = arith.select %17, %19, %20 : vector<4x16x64xi1>, vector<4x16x64xf32>
    %cst_18 = arith.constant dense<0x7F800000> : vector<4x64xf32>
    %22 = vector.multi_reduction <minimumf>, %21, %cst_18 [1] : vector<4x16x64xf32> to vector<4x64xf32>
    %23 = vector.shape_cast %22 : vector<4x64xf32> to vector<4x1x64xf32>
    %24 = vector.broadcast %4 : vector<1x16x64xf32> to vector<4x16x64xf32>
    %25 = vector.broadcast %23 : vector<4x1x64xf32> to vector<4x16x64xf32>
    %26 = arith.cmpf oeq, %24, %25 : vector<4x16x64xf32>
    %27 = arith.extui %26 : vector<4x16x64xi1> to vector<4x16x64xi32>
    %28 = arith.sitofp %27 : vector<4x16x64xi32> to vector<4x16x64xf32>
    "tpu.trace_start"() <{level = 10 : i32, message = "gdk,gkt->gdt"}> : () -> ()
    %cst_19 = arith.constant dense<0.000000e+00> : vector<4x8x64xf32>
    %29 = tpu.matmul %8, %28, %cst_19 {dimension_numbers = #tpu.dot_dimension_numbers<[2], [1], [1], [2], [0, 0, 0, 1, 1, 2], [0], [0]>} : vector<4x8x16xf32>, vector<4x16x64xf32>, vector<4x8x64xf32> -> vector<4x8x64xf32>
    "tpu.trace_stop"() : () -> ()
    %30 = arith.subf %29, %1 : vector<4x8x64xf32>
    %31 = arith.mulf %30, %30 : vector<4x8x64xf32>
    %cst_20 = arith.constant dense<0.000000e+00> : vector<4x64xf32>
    %32 = vector.multi_reduction <add>, %31, %cst_20 [1] : vector<4x8x64xf32> to vector<4x64xf32>
    %33 = vector.shape_cast %32 : vector<4x64xf32> to vector<4x1x64xf32>
    %cst_21 = arith.constant dense<0.000000e+00> : vector<4x1xf32>
    %34 = vector.multi_reduction <add>, %33, %cst_21 [2] : vector<4x1x64xf32> to vector<4x1xf32>
    %35 = vector.shape_cast %34 : vector<4x1xf32> to vector<4x1x1xf32>
    %cst_22 = arith.constant dense<0.000000e+00> : vector<4x16xf32>
    %36 = vector.multi_reduction <add>, %28, %cst_22 [2] : vector<4x16x64xf32> to vector<4x16xf32>
    %37 = vector.shape_cast %36 : vector<4x16xf32> to vector<4x16x1xf32>
    %38 = arith.addf %2, %29 : vector<4x8x64xf32>
    %39 = arith.subf %1, %29 : vector<4x8x64xf32>
    %c1 = arith.constant 1 : index
    %c0_23 = arith.constant 0 : index
    %c0_24 = arith.constant 0 : index
    %c0_25 = arith.constant 0 : index
    %40 = vector.load %arg3[%c1, %c0_23, %c0_24, %c0_25] : memref<2x4x16x8xf32, #tpu.memory_space<vmem>>, vector<1x4x16x8xf32>
    %41 = vector.shape_cast %40 : vector<1x4x16x8xf32> to vector<4x16x8xf32>
    %c1_26 = arith.constant 1 : index
    %c0_27 = arith.constant 0 : index
    %c0_28 = arith.constant 0 : index
    %c0_29 = arith.constant 0 : index
    %42 = vector.load %arg4[%c1_26, %c0_27, %c0_28, %c0_29] : memref<2x4x8x16xf32, #tpu.memory_space<vmem>>, vector<1x4x8x16xf32>
    %43 = vector.shape_cast %42 : vector<1x4x8x16xf32> to vector<4x8x16xf32>
    %c1_30 = arith.constant 1 : index
    %c0_31 = arith.constant 0 : index
    %c0_32 = arith.constant 0 : index
    %c0_33 = arith.constant 0 : index
    %44 = vector.load %arg5[%c1_30, %c0_31, %c0_32, %c0_33] : memref<2x4x16x1xf32, #tpu.memory_space<vmem>>, vector<1x4x16x1xf32>
    %45 = vector.shape_cast %44 : vector<1x4x16x1xf32> to vector<4x16x1xf32>
    "tpu.trace_start"() <{level = 10 : i32, message = "gkd,gdt->gkt"}> : () -> ()
    %cst_34 = arith.constant dense<0.000000e+00> : vector<4x16x64xf32>
    %46 = tpu.matmul %41, %39, %cst_34 {dimension_numbers = #tpu.dot_dimension_numbers<[2], [1], [1], [2], [0, 0, 0, 1, 1, 2], [0], [0]>} : vector<4x16x8xf32>, vector<4x8x64xf32>, vector<4x16x64xf32> -> vector<4x16x64xf32>
    "tpu.trace_stop"() : () -> ()
    %47 = vector.broadcast %45 : vector<4x16x1xf32> to vector<4x16x64xf32>
    %48 = arith.subf %46, %47 : vector<4x16x64xf32>
    %cst_35 = arith.constant dense<0xFF800000> : vector<4x64xf32>
    %49 = vector.multi_reduction <maximumf>, %48, %cst_35 [1] : vector<4x16x64xf32> to vector<4x64xf32>
    %50 = vector.shape_cast %49 : vector<4x64xf32> to vector<4x1x64xf32>
    %51 = vector.broadcast %50 : vector<4x1x64xf32> to vector<4x16x64xf32>
    %52 = arith.cmpf oge, %48, %51 : vector<4x16x64xf32>
    %cst_36 = arith.constant 1.600000e+01 : f32
    %53 = vector.shape_cast %4 : vector<1x16x64xf32> to vector<1x16x64xf32>
    %54 = vector.broadcast %53 : vector<1x16x64xf32> to vector<4x16x64xf32>
    %55 = vector.broadcast %cst_36 : f32 to vector<4x16x64xf32>
    %56 = arith.select %52, %54, %55 : vector<4x16x64xi1>, vector<4x16x64xf32>
    %cst_37 = arith.constant dense<0x7F800000> : vector<4x64xf32>
    %57 = vector.multi_reduction <minimumf>, %56, %cst_37 [1] : vector<4x16x64xf32> to vector<4x64xf32>
    %58 = vector.shape_cast %57 : vector<4x64xf32> to vector<4x1x64xf32>
    %59 = vector.broadcast %4 : vector<1x16x64xf32> to vector<4x16x64xf32>
    %60 = vector.broadcast %58 : vector<4x1x64xf32> to vector<4x16x64xf32>
    %61 = arith.cmpf oeq, %59, %60 : vector<4x16x64xf32>
    %62 = arith.extui %61 : vector<4x16x64xi1> to vector<4x16x64xi32>
    %63 = arith.sitofp %62 : vector<4x16x64xi32> to vector<4x16x64xf32>
    "tpu.trace_start"() <{level = 10 : i32, message = "gdk,gkt->gdt"}> : () -> ()
    %cst_38 = arith.constant dense<0.000000e+00> : vector<4x8x64xf32>
    %64 = tpu.matmul %43, %63, %cst_38 {dimension_numbers = #tpu.dot_dimension_numbers<[2], [1], [1], [2], [0, 0, 0, 1, 1, 2], [0], [0]>} : vector<4x8x16xf32>, vector<4x16x64xf32>, vector<4x8x64xf32> -> vector<4x8x64xf32>
    "tpu.trace_stop"() : () -> ()
    %65 = arith.subf %64, %39 : vector<4x8x64xf32>
    %66 = arith.mulf %65, %65 : vector<4x8x64xf32>
    %cst_39 = arith.constant dense<0.000000e+00> : vector<4x64xf32>
    %67 = vector.multi_reduction <add>, %66, %cst_39 [1] : vector<4x8x64xf32> to vector<4x64xf32>
    %68 = vector.shape_cast %67 : vector<4x64xf32> to vector<4x1x64xf32>
    %cst_40 = arith.constant dense<0.000000e+00> : vector<4x1xf32>
    %69 = vector.multi_reduction <add>, %68, %cst_40 [2] : vector<4x1x64xf32> to vector<4x1xf32>
    %70 = vector.shape_cast %69 : vector<4x1xf32> to vector<4x1x1xf32>
    %cst_41 = arith.constant dense<0.000000e+00> : vector<4x16xf32>
    %71 = vector.multi_reduction <add>, %63, %cst_41 [2] : vector<4x16x64xf32> to vector<4x16xf32>
    %72 = vector.shape_cast %71 : vector<4x16xf32> to vector<4x16x1xf32>
    %73 = arith.addf %38, %64 : vector<4x8x64xf32>
    %c0_42 = arith.constant 0 : index
    %c0_43 = arith.constant 0 : index
    %c0_44 = arith.constant 0 : index
    %c0_45 = arith.constant 0 : index
    %74 = vector.load %arg6[%c0_42, %c0_43, %c0_44, %c0_45] : memref<1x4x8x64xf32, #tpu.memory_space<vmem>>, vector<1x4x8x64xf32>
    %75 = vector.shape_cast %74 : vector<1x4x8x64xf32> to vector<4x8x64xf32>
    %76 = vector.shape_cast %73 : vector<4x8x64xf32> to vector<1x4x8x64xf32>
    tpu.vector_store %arg6[%c0_42, %c0_43, %c0_44, %c0_45], %76 {strides = array<i32>} : memref<1x4x8x64xf32, #tpu.memory_space<vmem>>, vector<1x4x8x64xf32>,
    %77 = tpu.concatenate %35, %70 in 2 : vector<4x1x1xf32>, vector<4x1x1xf32> -> vector<4x1x2xf32>
    %c0_46 = arith.constant 0 : index
    %c0_47 = arith.constant 0 : index
    %c0_48 = arith.constant 0 : index
    %c0_49 = arith.constant 0 : index
    %c0_50 = arith.constant 0 : index
    %78 = vector.load %arg7[%c0_46, %c0_47, %c0_48, %c0_49, %c0_50] : memref<1x1x4x1x2xf32, #tpu.memory_space<vmem>>, vector<1x1x4x1x2xf32>
    %79 = vector.shape_cast %78 : vector<1x1x4x1x2xf32> to vector<4x1x2xf32>
    %80 = vector.shape_cast %77 : vector<4x1x2xf32> to vector<1x1x4x1x2xf32>
    tpu.vector_store %arg7[%c0_46, %c0_47, %c0_48, %c0_49, %c0_50], %80 {strides = array<i32>} : memref<1x1x4x1x2xf32, #tpu.memory_space<vmem>>, vector<1x1x4x1x2xf32>,
    %81 = tpu.concatenate %37, %72 in 2 : vector<4x16x1xf32>, vector<4x16x1xf32> -> vector<4x16x2xf32>
    %c0_51 = arith.constant 0 : index
    %c0_52 = arith.constant 0 : index
    %c0_53 = arith.constant 0 : index
    %c0_54 = arith.constant 0 : index
    %c0_55 = arith.constant 0 : index
    %82 = vector.load %arg8[%c0_51, %c0_52, %c0_53, %c0_54, %c0_55] : memref<1x1x4x16x2xf32, #tpu.memory_space<vmem>>, vector<1x1x4x16x2xf32>
    %83 = vector.shape_cast %82 : vector<1x1x4x16x2xf32> to vector<4x16x2xf32>
    %84 = vector.shape_cast %81 : vector<4x16x2xf32> to vector<1x1x4x16x2xf32>
    tpu.vector_store %arg8[%c0_51, %c0_52, %c0_53, %c0_54, %c0_55], %84 {strides = array<i32>} : memref<1x1x4x16x2xf32, #tpu.memory_space<vmem>>, vector<1x1x4x16x2xf32>,
    return
  }
  func.func @transform_0(%arg0: i32, %arg1: i32) -> (i32, i32, i32, i32) {
    %c0_i32 = arith.constant 0 : i32
    %c0_i32_0 = arith.constant 0 : i32
    %c0_i32_1 = arith.constant 0 : i32
    return %arg0, %c0_i32, %c0_i32_0, %arg1 : i32, i32, i32, i32
  }
  func.func @transform_1(%arg0: i32, %arg1: i32) -> (i32, i32, i32, i32) {
    %c0_i32 = arith.constant 0 : i32
    %c0_i32_0 = arith.constant 0 : i32
    %c0_i32_1 = arith.constant 0 : i32
    %c0_i32_2 = arith.constant 0 : i32
    %c0_i32_3 = arith.constant 0 : i32
    return %c0_i32, %c0_i32_0, %c0_i32_1, %c0_i32_2 : i32, i32, i32, i32
  }
  func.func @transform_2(%arg0: i32, %arg1: i32) -> (i32, i32, i32, i32) {
    %c0_i32 = arith.constant 0 : i32
    %c0_i32_0 = arith.constant 0 : i32
    %c0_i32_1 = arith.constant 0 : i32
    %c0_i32_2 = arith.constant 0 : i32
    %c0_i32_3 = arith.constant 0 : i32
    return %c0_i32, %c0_i32_0, %c0_i32_1, %c0_i32_2 : i32, i32, i32, i32
  }
  func.func @transform_3(%arg0: i32, %arg1: i32) -> (i32, i32, i32, i32) {
    %c0_i32 = arith.constant 0 : i32
    %c0_i32_0 = arith.constant 0 : i32
    %c0_i32_1 = arith.constant 0 : i32
    %c0_i32_2 = arith.constant 0 : i32
    %c0_i32_3 = arith.constant 0 : i32
    return %c0_i32, %c0_i32_0, %c0_i32_1, %c0_i32_2 : i32, i32, i32, i32
  }
  func.func @transform_4(%arg0: i32, %arg1: i32) -> (i32, i32, i32, i32) {
    %c0_i32 = arith.constant 0 : i32
    %c0_i32_0 = arith.constant 0 : i32
    %c0_i32_1 = arith.constant 0 : i32
    return %arg0, %c0_i32, %c0_i32_0, %arg1 : i32, i32, i32, i32
  }
  func.func @transform_5(%arg0: i32, %arg1: i32) -> (i32, i32, i32, i32, i32) {
    %c0_i32 = arith.constant 0 : i32
    %c0_i32_0 = arith.constant 0 : i32
    %c0_i32_1 = arith.constant 0 : i32
    %c0_i32_2 = arith.constant 0 : i32
    return %arg0, %arg1, %c0_i32, %c0_i32_0, %c0_i32_1 : i32, i32, i32, i32, i32
  }
  func.func @transform_6(%arg0: i32, %arg1: i32) -> (i32, i32, i32, i32, i32) {
    %c0_i32 = arith.constant 0 : i32
    %c0_i32_0 = arith.constant 0 : i32
    %c0_i32_1 = arith.constant 0 : i32
    %c0_i32_2 = arith.constant 0 : i32
    return %arg0, %arg1, %c0_i32, %c0_i32_0, %c0_i32_1 : i32, i32, i32, i32, i32
  }
}

</mosaic_0001>

<llo_original>
// kernel: tpu_custom_call.1
$region0: #{tpu_custom_call.1}
  #allocation0 [shape = 'u32[]', space=smem, size = 0x4, offset = 0x4, fixed_abs, tag = 'smem constant byte address 0x4 - core index']
  #allocation1 [shape = 'u32[72,128]{1,0:T(1,128)}', space=vmem, size = 0x9000, scoped, tag = 'internal scratch']
  %s0 = inlined_call_operand.vmem [shape: f32[2,4,8,64], index: 0, kind: input, shape index: {}]
  %s1 = inlined_call_operand.vmem [shape: f32[2,4,16,8], index: 1, kind: input, shape index: {}]
  %s2 = inlined_call_operand.vmem [shape: f32[2,4,8,16], index: 2, kind: input, shape index: {}]
  %s3 = inlined_call_operand.vmem [shape: f32[2,4,16,1], index: 3, kind: input, shape index: {}]
  %s4 = inlined_call_operand.hbm [shape: f32[2,4,8,64], index: 4, kind: output, shape index: {0}]
  %s5 = inlined_call_operand.vmem [shape: f32[2,1,4,1,2], index: 5, kind: output, shape index: {1}]
  %s6 = inlined_call_operand.vmem [shape: f32[2,1,4,16,2], index: 6, kind: output, shape index: {2}]
  %7 = xla_tuple %s4, %s5, %s6
  %s8 = sld [smem:[#allocation0]]
  $region65: #{tpu_custom_call.1} parent=0
    _
  %s10 = ssub.s32 1, %s8
  %s11 = scalar_select 0, %s10, %s8
  $region1: #{tpu_custom_call.1} parent=0
    #allocation2 [shape = 'u8[32768]{0}', space=vmem, size = 0x8000, scoped, tag = 'output window, operand 0']
    #allocation3 [shape = 's32[2]{0}', space=sflag, size = 0x8, scoped, tag = 'scoped memory for tpu_custom_call.1']
    %12 = vsyncpa [#allocation3], 0
    %s13 = scalar_lea.sflag [#allocation3], 1
    %14 = vsyncpa %s13, 0
    loop: start=0, step=1, limit=4
    $region2: #{tpu_custom_call.1} parent=1 // loop_pre_header
      _
    $region3: #{tpu_custom_call.1} parent=1 // loop_header
      %s16 = sphi 0, %s20
      %p17 = scmp.ge.s32.totalorder %s16, 4
      %s23 = sphi 0, %s35
      %s24 = sphi 0, %s31
      %s25 = sphi 0, %s23
      %s26 = sphi 0, %s24
      %s27 = sphi 0, %s25
      %s28 = sphi 0, %s26
      %s40 = sphi 0, %s42
      %s43 = sphi 0, %s40
      %s44 = sphi 0, %s43
      %s60 = sphi 0, %s44
      %s64 = sphi 0, %s64
      %s66 = sphi 0, %s64
      %s67 = sphi 0, %s66
      %s81 = sphi 0, %s67
      %s85 = sphi 0, %s85
      %s87 = sphi 0, %s85
      %s88 = sphi 0, %s87
      %s102 = sphi 0, %s88
      %s106 = sphi 0, %s106
      %s108 = sphi 0, %s106
      %s109 = sphi 0, %s108
      %s123 = sphi 0, %s109
      %s131 = sphi 0, %s133
      %s134 = sphi 0, %s131
      %s135 = sphi 0, %s134
      %s151 = sphi 0, %s135
      %s159 = sphi 0, %s161
      %s162 = sphi 0, %s159
      %s163 = sphi 0, %s162
      %s179 = sphi 0, %s163
      %s187 = sphi 0, %s189
      %s190 = sphi 0, %s187
      %s191 = sphi 0, %s190
      %s207 = sphi 0, %s191
    $region4: #{tpu_custom_call.1} parent=1 // loop_header_branch
      %19 = sbr.rel (%p17) target = $region8
    $region5: #{tpu_custom_call.1} parent=1 // loop_body
      %s21 = ssub.s32 %s16, 1
      %s22 = ssub.s32 %s16, 2
      %s29 = sadd.s32 1, %s24
      %p30 = scmp.ge.s32.totalorder %s29, 1
      %s31 = scalar_select %p30, 0, %s29
      %s32 = sadd.s32 1, %s23
      %s33 = scalar_select %p30, %s32, %s23
      %p34 = scmp.ge.s32.totalorder %s33, 2
      %s35 = scalar_select %p34, 0, %s33
      %s36 = ssub.s32 %s23, %s35
      %s37 = ssub.s32 %s24, %s31
      %s38 = sor.u32 %s36, %s37
      %p39 = scmp.eq.s32.totalorder %s38, 0
      %s41 = sadd.s32 %s40, 1
      %s42 = scalar_select %p39, %s40, %s41
      %p45 = pneg %p39
      %p46 = scmp.eq.s32.totalorder %s16, 1
      %p47 = por %p45, %p46
      %p48 = scmp.ne.s32.totalorder %s40, %s43
      %p49 = scmp.eq.s32.totalorder %s16, 0
      %p50 = por %p48, %p49
      %p51 = scmp.ne.s32.totalorder %s40, %s43
      %p52 = scmp.eq.s32.totalorder %s21, 1
      %p53 = por %p51, %p52
      %p54 = scmp.ne.s32.totalorder %s43, %s44
      %p55 = scmp.eq.s32.totalorder %s21, 0
      %p56 = por %p54, %p55
      %p57 = scmp.ne.s32.totalorder %s43, %s44
      %p58 = scmp.eq.s32.totalorder %s22, 1
      %p59 = por %p57, %p58
      %p61 = scmp.ne.s32.totalorder %s44, %s60
      %p62 = scmp.eq.s32.totalorder %s22, 0
      %p63 = por %p61, %p62
      %s65 = sadd.s32 %s64, 1
      %p68 = scmp.eq.s32.totalorder %s16, 1
      %p69 = scmp.ne.s32.totalorder %s64, %s66
      %p70 = scmp.eq.s32.totalorder %s16, 0
      %p71 = por %p69, %p70
      %p72 = scmp.ne.s32.totalorder %s64, %s66
      %p73 = scmp.eq.s32.totalorder %s21, 1
      %p74 = por %p72, %p73
      %p75 = scmp.ne.s32.totalorder %s66, %s67
      %p76 = scmp.eq.s32.totalorder %s21, 0
      %p77 = por %p75, %p76
      %p78 = scmp.ne.s32.totalorder %s66, %s67
      %p79 = scmp.eq.s32.totalorder %s22, 1
      %p80 = por %p78, %p79
      %p82 = scmp.ne.s32.totalorder %s67, %s81
      %p83 = scmp.eq.s32.totalorder %s22, 0
      %p84 = por %p82, %p83
      %s86 = sadd.s32 %s85, 1
      %p89 = scmp.eq.s32.totalorder %s16, 1
      %p90 = scmp.ne.s32.totalorder %s85, %s87
      %p91 = scmp.eq.s32.totalorder %s16, 0
      %p92 = por %p90, %p91
      %p93 = scmp.ne.s32.totalorder %s85, %s87
      %p94 = scmp.eq.s32.totalorder %s21, 1
      %p95 = por %p93, %p94
      %p96 = scmp.ne.s32.totalorder %s87, %s88
      %p97 = scmp.eq.s32.totalorder %s21, 0
      %p98 = por %p96, %p97
      %p99 = scmp.ne.s32.totalorder %s87, %s88
      %p100 = scmp.eq.s32.totalorder %s22, 1
      %p101 = por %p99, %p100
      %p103 = scmp.ne.s32.totalorder %s88, %s102
      %p104 = scmp.eq.s32.totalorder %s22, 0
      %p105 = por %p103, %p104
      %s107 = sadd.s32 %s106, 1
      %p110 = scmp.eq.s32.totalorder %s16, 1
      %p111 = scmp.ne.s32.totalorder %s106, %s108
      %p112 = scmp.eq.s32.totalorder %s16, 0
      %p113 = por %p111, %p112
      %p114 = scmp.ne.s32.totalorder %s106, %s108
      %p115 = scmp.eq.s32.totalorder %s21, 1
      %p116 = por %p114, %p115
      %p117 = scmp.ne.s32.totalorder %s108, %s109
      %p118 = scmp.eq.s32.totalorder %s21, 0
      %p119 = por %p117, %p118
      %p120 = scmp.ne.s32.totalorder %s108, %s109
      %p121 = scmp.eq.s32.totalorder %s22, 1
      %p122 = por %p120, %p121
      %p124 = scmp.ne.s32.totalorder %s109, %s123
      %p125 = scmp.eq.s32.totalorder %s22, 0
      %p126 = por %p124, %p125
      %s127 = ssub.s32 %s23, %s35
      %s128 = ssub.s32 %s24, %s31
      %s129 = sor.u32 %s127, %s128
      %p130 = scmp.eq.s32.totalorder %s129, 0
      %s132 = sadd.s32 %s131, 1
      %s133 = scalar_select %p130, %s131, %s132
      %p136 = pneg %p130
      %p137 = scmp.eq.s32.totalorder %s16, 1
      %p138 = por %p136, %p137
      %p139 = scmp.ne.s32.totalorder %s131, %s134
      %p140 = scmp.eq.s32.totalorder %s16, 0
      %p141 = por %p139, %p140
      %p142 = scmp.ne.s32.totalorder %s131, %s134
      %p143 = scmp.eq.s32.totalorder %s21, 1
      %p144 = por %p142, %p143
      %p145 = scmp.ne.s32.totalorder %s134, %s135
      %p146 = scmp.eq.s32.totalorder %s21, 0
      %p147 = por %p145, %p146
      %p148 = scmp.ne.s32.totalorder %s134, %s135
      %p149 = scmp.eq.s32.totalorder %s22, 1
      %p150 = por %p148, %p149
      %p152 = scmp.ne.s32.totalorder %s135, %s151
      %p153 = scmp.eq.s32.totalorder %s22, 0
      %p154 = por %p152, %p153
      %s155 = ssub.s32 %s23, %s35
      %s156 = ssub.s32 %s24, %s31
      %s157 = sor.u32 %s155, %s156
      %p158 = scmp.eq.s32.totalorder %s157, 0
      %s160 = sadd.s32 %s159, 1
      %s161 = scalar_select %p158, %s159, %s160
      %p164 = pneg %p158
      %p165 = scmp.eq.s32.totalorder %s16, 1
      %p166 = por %p164, %p165
      %p167 = scmp.ne.s32.totalorder %s159, %s162
      %p168 = scmp.eq.s32.totalorder %s16, 0
      %p169 = por %p167, %p168
      %p170 = scmp.ne.s32.totalorder %s159, %s162
      %p171 = scmp.eq.s32.totalorder %s21, 1
      %p172 = por %p170, %p171
      %p173 = scmp.ne.s32.totalorder %s162, %s163
      %p174 = scmp.eq.s32.totalorder %s21, 0
      %p175 = por %p173, %p174
      %p176 = scmp.ne.s32.totalorder %s162, %s163
      %p177 = scmp.eq.s32.totalorder %s22, 1
      %p178 = por %p176, %p177
      %p180 = scmp.ne.s32.totalorder %s163, %s179
      %p181 = scmp.eq.s32.totalorder %s22, 0
      %p182 = por %p180, %p181
      %s183 = ssub.s32 %s23, %s35
      %s184 = ssub.s32 %s24, %s31
      %s185 = sor.u32 %s183, %s184
      %p186 = scmp.eq.s32.totalorder %s185, 0
      %s188 = sadd.s32 %s187, 1
      %s189 = scalar_select %p186, %s187, %s188
      %p192 = pneg %p186
      %p193 = scmp.eq.s32.totalorder %s16, 1
      %p194 = por %p192, %p193
      %p195 = scmp.ne.s32.totalorder %s187, %s190
      %p196 = scmp.eq.s32.totalorder %s16, 0
      %p197 = por %p195, %p196
      %p198 = scmp.ne.s32.totalorder %s187, %s190
      %p199 = scmp.eq.s32.totalorder %s21, 1
      %p200 = por %p198, %p199
      %p201 = scmp.ne.s32.totalorder %s190, %s191
      %p202 = scmp.eq.s32.totalorder %s21, 0
      %p203 = por %p201, %p202
      %p204 = scmp.ne.s32.totalorder %s190, %s191
      %p205 = scmp.eq.s32.totalorder %s22, 1
      %p206 = por %p204, %p205
      %p208 = scmp.ne.s32.totalorder %s191, %s207
      %p209 = scmp.eq.s32.totalorder %s22, 0
      %p210 = por %p208, %p209
      %p211 = scmp.le.s32.totalorder 1, %s16
      %p212 = scmp.lt.s32.totalorder %s16, 3
      %p213 = pnand %p211, %p212
      %p214 = pneg %p213
      // Predicated region
      $region9: #{tpu_custom_call.1} parent=5 // pred_check
        _
      $region10: #{tpu_custom_call.1} parent=5 // pred_check_branch
        %216 = sbr.rel (%p213) target = $region12
      $region11: #{tpu_custom_call.1} parent=5 // pred_region
        %s217 = ssub.s32 %s16, 1
        // Predicated region
        $region13: #{tpu_custom_call.1} parent=11 // pred_check
          %p218 = pneg %p77
        $region14: #{tpu_custom_call.1} parent=11 // pred_check_branch
          %220 = sbr.rel (%p218) target = $region16
        $region15: #{tpu_custom_call.1} parent=11 // pred_region
          _
        $region16: #{tpu_custom_call.1} parent=11 // pred_fallthru
          _
        // Predicated region
        $region17: #{tpu_custom_call.1} parent=11 // pred_check
          %p221 = pneg %p98
        $region18: #{tpu_custom_call.1} parent=11 // pred_check_branch
          %223 = sbr.rel (%p221) target = $region20
        $region19: #{tpu_custom_call.1} parent=11 // pred_region
          _
        $region20: #{tpu_custom_call.1} parent=11 // pred_fallthru
          _
        // Predicated region
        $region21: #{tpu_custom_call.1} parent=11 // pred_check
          %p224 = pneg %p119
        $region22: #{tpu_custom_call.1} parent=11 // pred_check_branch
          %226 = sbr.rel (%p224) target = $region24
        $region23: #{tpu_custom_call.1} parent=11 // pred_region
          _
        $region24: #{tpu_custom_call.1} parent=11 // pred_fallthru
          _
      $region12: #{tpu_custom_call.1} parent=5 // pred_fallthru
        _
      %p227 = scmp.lt.s32.totalorder %s16, 2
      // Predicated region
      $region25: #{tpu_custom_call.1} parent=5 // pred_check
        %p228 = pneg %p227
      $region26: #{tpu_custom_call.1} parent=5 // pred_check_branch
        %230 = sbr.rel (%p228) target = $region28
      $region27: #{tpu_custom_call.1} parent=5 // pred_region
        // Predicated region
        $region29: #{tpu_custom_call.1} parent=27 // pred_check
          %p231 = pneg %p50
        $region30: #{tpu_custom_call.1} parent=27 // pred_check_branch
          %233 = sbr.rel (%p231) target = $region32
        $region31: #{tpu_custom_call.1} parent=27 // pred_region
          %p234 = scmp.lt.s32.totalorder %s23, 1
          %s235 = scalar_select %p234, %s23, 1
          %p236 = scmp.lt.s32.totalorder %s24, 0
          %s237 = scalar_select %p236, %s24, 0
          %s238 = smul.addr %s235, 4
          %s239 = sadd.s32 %s237, %s238
          %s240 = smul.addr %s239, 8
          %s241 = scalar_lea.vmem %s0, %s240
        $region32: #{tpu_custom_call.1} parent=27 // pred_fallthru
          _
      $region28: #{tpu_custom_call.1} parent=5 // pred_fallthru
        _
      %p242 = scmp.le.s32.totalorder 1, %s16
      %p243 = scmp.lt.s32.totalorder %s16, 3
      %p244 = pnand %p242, %p243
      %p245 = pneg %p244
      // Predicated region
      $region33: #{tpu_custom_call.1} parent=5 // pred_check
        _
      $region34: #{tpu_custom_call.1} parent=5 // pred_check_branch
        %247 = sbr.rel (%p244) target = $region36
      $region35: #{tpu_custom_call.1} parent=5 // pred_region
        %s248 = ssub.s32 %s16, 1
        %p249 = scmp.lt.s32.totalorder %s25, 1
        %s250 = scalar_select %p249, %s25, 1
        %p251 = scmp.lt.s32.totalorder %s26, 0
        %s252 = scalar_select %p251, %s26, 0
        %s253 = smul.addr %s250, 4
        %s254 = sadd.s32 %s252, %s253
        %s255 = smul.addr %s254, 8
        %s256 = scalar_lea.vmem %s0, %s255
        %p257 = pneg %p56
        %p258 = pneg %p53
        %p259 = pneg %p77
        %p260 = pneg %p74
        %p261 = pneg %p98
        %p262 = pneg %p95
        %p263 = pneg %p119
        %p264 = pneg %p116
        %p265 = pneg %p147
        %p266 = pneg %p144
        %s267 = sand.u32 %s134, 1
        %s268 = scalar_lea.sflag [#allocation3], %s267
        %s269 = sand.u32 %s134, 1
        %s270 = smul.addr %s269, 32
        %s271 = scalar_lea.vmem [#allocation2], %s270
        %p272 = pneg %p175
        %p273 = pneg %p172
        %p274 = scmp.lt.s32.totalorder %s25, 1
        %s275 = scalar_select %p274, %s25, 1
        %p276 = scmp.lt.s32.totalorder %s26, 0
        %s277 = scalar_select %p276, %s26, 0
        %s278 = smul.addr %s277, 4
        %s279 = smul.addr %s275, 4
        %s280 = sadd.s32 %s278, %s279
        %s281 = scalar_lea.vmem %s5, %s280
        %p282 = pneg %p203
        %p283 = pneg %p200
        %p284 = scmp.lt.s32.totalorder %s25, 1
        %s285 = scalar_select %p284, %s25, 1
        %p286 = scmp.lt.s32.totalorder %s26, 0
        %s287 = scalar_select %p286, %s26, 0
        %s288 = smul.addr %s287, 8
        %s289 = smul.addr %s285, 8
        %s290 = sadd.s32 %s288, %s289
        %s291 = smul.addr %s290, 8
        %s292 = scalar_lea.vmem %s6, %s291
        %p293 = scmp.lt.s32.totalorder %s25, 1
        %s294 = scalar_select %p293, %s25, 1
        %p295 = scmp.lt.s32.totalorder %s26, 0
        %s296 = scalar_select %p295, %s26, 0
        %s297 = smul.addr %s294, 4
        %s298 = sadd.s32 %s296, %s297
        %s299 = smul.addr %s298, 8
        %s300 = scalar_lea.vmem %s0, %s299
        %p301 = scmp.lt.s32.totalorder %s25, 1
        %s302 = scalar_select %p301, %s25, 1
        %p303 = scmp.lt.s32.totalorder %s26, 0
        %s304 = scalar_select %p303, %s26, 0
        %s305 = smul.addr %s304, 4
        %s306 = smul.addr %s302, 4
        %s307 = sadd.s32 %s305, %s306
        %s308 = scalar_lea.vmem %s5, %s307
        %p309 = scmp.lt.s32.totalorder %s25, 1
        %s310 = scalar_select %p309, %s25, 1
        %p311 = scmp.lt.s32.totalorder %s26, 0
        %s312 = scalar_select %p311, %s26, 0
        %s313 = smul.addr %s312, 8
        %s314 = smul.addr %s310, 8
        %s315 = sadd.s32 %s313, %s314
        %s316 = smul.addr %s315, 8
        %s317 = scalar_lea.vmem %s6, %s316
        %v318 = vld [vmem:[%s300] sm:$0xff]
        %v319 = vld [vmem:[%s300 + $0x8] sm:$0xff]
        %v320 = vld [vmem:[%s300 + $0x10] sm:$0xff]
        %v321 = vld [vmem:[%s300 + $0x18] sm:$0xff]
        %v322 = vlaneseq
        %v323 = vshrl.u32 %v322, 7
        %v324 = vadd.s32 %v323, 8
        %v325 = vcvt.s32.f32 %v323
        %v326 = vcvt.s32.f32 %v324
        %v327 = vld [vmem:[%s1] sm:$0xff]
        %v328 = vld [vmem:[%s1 + $0x8] sm:$0xff]
        %v329 = vld [vmem:[%s1 + $0x10] sm:$0xff]
        %v330 = vld [vmem:[%s1 + $0x18] sm:$0xff]
        %v331 = vld [vmem:[%s1 + $0x20] sm:$0xff]
        %v332 = vld [vmem:[%s1 + $0x28] sm:$0xff]
        %v333 = vld [vmem:[%s1 + $0x30] sm:$0xff]
        %v334 = vld [vmem:[%s1 + $0x38] sm:$0xff]
        %v335 = vld [vmem:[%s2] sm:$0xff]
        %v336 = vld [vmem:[%s2 + $0x8] sm:$0xff]
        %v337 = vld [vmem:[%s2 + $0x10] sm:$0xff]
        %v338 = vld [vmem:[%s2 + $0x18] sm:$0xff]
        %v339 = vld [vmem:[%s3] sm:$0xff]
        %v340 = vld [vmem:[%s3 + $0x8] sm:$0xff]
        %v341 = vld [vmem:[%s3 + $0x10] sm:$0xff]
        %v342 = vld [vmem:[%s3 + $0x18] sm:$0xff]
        %v343 = vld [vmem:[%s3 + $0x20] sm:$0xff]
        %v344 = vld [vmem:[%s3 + $0x28] sm:$0xff]
        %v345 = vld [vmem:[%s3 + $0x30] sm:$0xff]
        %v346 = vld [vmem:[%s3 + $0x38] sm:$0xff]
        %vm347 = vcmask 64512
        %v349 = vsel %vm347, %v327, 0
        %v352 = vsel %vm347, %v328, 0
        %354 = vmatpush.msra.mxu0 0.0
        %355 = vmatpush.msra.mxu0 0.0
        %356 = vmatpush.msra.mxu0 0.0
        %357 = vmatpush.msra.mxu0 0.0
        %358 = vmatpush.msra.mxu0 0.0
        %359 = vmatpush.msra.mxu0 0.0
        %360 = vmatpush.msra.mxu0 0.0
        %361 = vmatpush.msra.mxu0 0.0
        %362 = vmatpush.msra.mxu0 0.0
        %363 = vmatpush.msra.mxu0 0.0
        %364 = vmatpush.msra.mxu0 0.0
        %365 = vmatpush.msra.mxu0 0.0
        %366 = vmatpush.msra.mxu0 0.0
        %367 = vmatpush.msra.mxu0 0.0
        %368 = vmatpush.msra.mxu0 0.0
        %369 = vmatpush.msra.mxu0 %v318
        %370 = vmatmul.f32.gmra.mxu0 %v349
        %v371 = vpop.f32.mrf.mxu0
        %v372 = vadd.f32 0.0, %v371
        %373 = vmatmul.f32.gmra.mxu0 %v352
        %v374 = vpop.f32.mrf.mxu0
        %v375 = vadd.f32 0.0, %v374
        %376 = vdwg.mxu0
        %v378 = vsel %vm347, %v329, 0
        %v381 = vsel %vm347, %v330, 0
        %383 = vmatpush.msra.mxu0 0.0
        %384 = vmatpush.msra.mxu0 0.0
        %385 = vmatpush.msra.mxu0 0.0
        %386 = vmatpush.msra.mxu0 0.0
        %387 = vmatpush.msra.mxu0 0.0
        %388 = vmatpush.msra.mxu0 0.0
        %389 = vmatpush.msra.mxu0 0.0
        %390 = vmatpush.msra.mxu0 0.0
        %391 = vmatpush.msra.mxu0 0.0
        %392 = vmatpush.msra.mxu0 0.0
        %393 = vmatpush.msra.mxu0 0.0
        %394 = vmatpush.msra.mxu0 0.0
        %395 = vmatpush.msra.mxu0 0.0
        %396 = vmatpush.msra.mxu0 0.0
        %397 = vmatpush.msra.mxu0 0.0
        %398 = vmatpush.msra.mxu0 %v319
        %399 = vmatmul.f32.gmra.mxu0 %v378
        %v400 = vpop.f32.mrf.mxu0
        %v401 = vadd.f32 0.0, %v400
        %402 = vmatmul.f32.gmra.mxu0 %v381
        %v403 = vpop.f32.mrf.mxu0
        %v404 = vadd.f32 0.0, %v403
        %405 = vdwg.mxu0
        %v407 = vsel %vm347, %v331, 0
        %v410 = vsel %vm347, %v332, 0
        %412 = vmatpush.msra.mxu0 0.0
        %413 = vmatpush.msra.mxu0 0.0
        %414 = vmatpush.msra.mxu0 0.0
        %415 = vmatpush.msra.mxu0 0.0
        %416 = vmatpush.msra.mxu0 0.0
        %417 = vmatpush.msra.mxu0 0.0
        %418 = vmatpush.msra.mxu0 0.0
        %419 = vmatpush.msra.mxu0 0.0
        %420 = vmatpush.msra.mxu0 0.0
        %421 = vmatpush.msra.mxu0 0.0
        %422 = vmatpush.msra.mxu0 0.0
        %423 = vmatpush.msra.mxu0 0.0
        %424 = vmatpush.msra.mxu0 0.0
        %425 = vmatpush.msra.mxu0 0.0
        %426 = vmatpush.msra.mxu0 0.0
        %427 = vmatpush.msra.mxu0 %v320
        %428 = vmatmul.f32.gmra.mxu0 %v407
        %v429 = vpop.f32.mrf.mxu0
        %v430 = vadd.f32 0.0, %v429
        %431 = vmatmul.f32.gmra.mxu0 %v410
        %v432 = vpop.f32.mrf.mxu0
        %v433 = vadd.f32 0.0, %v432
        %434 = vdwg.mxu0
        %v436 = vsel %vm347, %v333, 0
        %v439 = vsel %vm347, %v334, 0
        %441 = vmatpush.msra.mxu0 0.0
        %442 = vmatpush.msra.mxu0 0.0
        %443 = vmatpush.msra.mxu0 0.0
        %444 = vmatpush.msra.mxu0 0.0
        %445 = vmatpush.msra.mxu0 0.0
        %446 = vmatpush.msra.mxu0 0.0
        %447 = vmatpush.msra.mxu0 0.0
        %448 = vmatpush.msra.mxu0 0.0
        %449 = vmatpush.msra.mxu0 0.0
        %450 = vmatpush.msra.mxu0 0.0
        %451 = vmatpush.msra.mxu0 0.0
        %452 = vmatpush.msra.mxu0 0.0
        %453 = vmatpush.msra.mxu0 0.0
        %454 = vmatpush.msra.mxu0 0.0
        %455 = vmatpush.msra.mxu0 0.0
        %456 = vmatpush.msra.mxu0 %v321
        %457 = vmatmul.f32.gmra.mxu0 %v436
        %v458 = vpop.f32.mrf.mxu0
        %v459 = vadd.f32 0.0, %v458
        %460 = vmatmul.f32.gmra.mxu0 %v439
        %v461 = vpop.f32.mrf.mxu0
        %v462 = vadd.f32 0.0, %v461
        %463 = vdwg.mxu0
        %465 = vset.pattern.permute.xlu0 0
        %466 = vperm.xlu0 %465, %v339
        %v467 = vpop.permute.xlu0 %466
        %470 = vset.pattern.permute.xlu0 0
        %471 = vperm.xlu0 %470, %v340
        %v472 = vpop.permute.xlu0 %471
        %475 = vset.pattern.permute.xlu0 0
        %476 = vperm.xlu0 %475, %v341
        %v477 = vpop.permute.xlu0 %476
        %480 = vset.pattern.permute.xlu0 0
        %481 = vperm.xlu0 %480, %v342
        %v482 = vpop.permute.xlu0 %481
        %485 = vset.pattern.permute.xlu0 0
        %486 = vperm.xlu0 %485, %v343
        %v487 = vpop.permute.xlu0 %486
        %490 = vset.pattern.permute.xlu0 0
        %491 = vperm.xlu0 %490, %v344
        %v492 = vpop.permute.xlu0 %491
        %495 = vset.pattern.permute.xlu0 0
        %496 = vperm.xlu0 %495, %v345
        %v497 = vpop.permute.xlu0 %496
        %500 = vset.pattern.permute.xlu0 0
        %501 = vperm.xlu0 %500, %v346
        %v502 = vpop.permute.xlu0 %501
        %v504 = vsub.f32 %v372, %v467
        %v505 = vsub.f32 %v375, %v472
        %v506 = vsub.f32 %v401, %v477
        %v507 = vsub.f32 %v404, %v482
        %v508 = vsub.f32 %v430, %v487
        %v509 = vsub.f32 %v433, %v492
        %v510 = vsub.f32 %v459, %v497
        %v511 = vsub.f32 %v462, %v502
        %vm512 = vcmask 523264
        %v513 = vsel %vm512, %v504, -inf
        %v514 = vsel %vm512, %v505, -inf
        %v515 = vmax.f32 %v513, %v514
        %v516 = vrot.slane %v515, 4
        %v517 = vmax.f32 %v515, %v516
        %v518 = vrot.slane %v517, 2
        %v519 = vmax.f32 %v517, %v518
        %v520 = vrot.slane %v519, 1
        %v521 = vmax.f32 %v519, %v520
        %v522 = vsel %vm512, %v506, -inf
        %v523 = vsel %vm512, %v507, -inf
        %v524 = vmax.f32 %v522, %v523
        %v525 = vrot.slane %v524, 4
        %v526 = vmax.f32 %v524, %v525
        %v527 = vrot.slane %v526, 2
        %v528 = vmax.f32 %v526, %v527
        %v529 = vrot.slane %v528, 1
        %v530 = vmax.f32 %v528, %v529
        %v531 = vsel %vm512, %v508, -inf
        %v532 = vsel %vm512, %v509, -inf
        %v533 = vmax.f32 %v531, %v532
        %v534 = vrot.slane %v533, 4
        %v535 = vmax.f32 %v533, %v534
        %v536 = vrot.slane %v535, 2
        %v537 = vmax.f32 %v535, %v536
        %v538 = vrot.slane %v537, 1
        %v539 = vmax.f32 %v537, %v538
        %v540 = vsel %vm512, %v510, -inf
        %v541 = vsel %vm512, %v511, -inf
        %v542 = vmax.f32 %v540, %v541
        %v543 = vrot.slane %v542, 4
        %v544 = vmax.f32 %v542, %v543
        %v545 = vrot.slane %v544, 2
        %v546 = vmax.f32 %v544, %v545
        %v547 = vrot.slane %v546, 1
        %v548 = vmax.f32 %v546, %v547
        %vm549 = vcmp.ge.f32.partialorder %v504, %v521
        %vm550 = vcmp.ge.f32.partialorder %v505, %v521
        %vm551 = vcmp.ge.f32.partialorder %v506, %v530
        %vm552 = vcmp.ge.f32.partialorder %v507, %v530
        %vm553 = vcmp.ge.f32.partialorder %v508, %v539
        %vm554 = vcmp.ge.f32.partialorder %v509, %v539
        %vm555 = vcmp.ge.f32.partialorder %v510, %v548
        %vm556 = vcmp.ge.f32.partialorder %v511, %v548
        %v557 = vsel %vm549, %v325, 16.0
        %v558 = vsel %vm550, %v326, 16.0
        %v559 = vsel %vm551, %v325, 16.0
        %v560 = vsel %vm552, %v326, 16.0
        %v561 = vsel %vm553, %v325, 16.0
        %v562 = vsel %vm554, %v326, 16.0
        %v563 = vsel %vm555, %v325, 16.0
        %v564 = vsel %vm556, %v326, 16.0
        %v565 = vsel %vm512, %v557, inf
        %v566 = vsel %vm512, %v558, inf
        %v567 = vmin.f32 %v565, %v566
        %v568 = vrot.slane %v567, 4
        %v569 = vmin.f32 %v567, %v568
        %v570 = vrot.slane %v569, 2
        %v571 = vmin.f32 %v569, %v570
        %v572 = vrot.slane %v571, 1
        %v573 = vmin.f32 %v571, %v572
        %v574 = vsel %vm512, %v559, inf
        %v575 = vsel %vm512, %v560, inf
        %v576 = vmin.f32 %v574, %v575
        %v577 = vrot.slane %v576, 4
        %v578 = vmin.f32 %v576, %v577
        %v579 = vrot.slane %v578, 2
        %v580 = vmin.f32 %v578, %v579
        %v581 = vrot.slane %v580, 1
        %v582 = vmin.f32 %v580, %v581
        %v583 = vsel %vm512, %v561, inf
        %v584 = vsel %vm512, %v562, inf
        %v585 = vmin.f32 %v583, %v584
        %v586 = vrot.slane %v585, 4
        %v587 = vmin.f32 %v585, %v586
        %v588 = vrot.slane %v587, 2
        %v589 = vmin.f32 %v587, %v588
        %v590 = vrot.slane %v589, 1
        %v591 = vmin.f32 %v589, %v590
        %v592 = vsel %vm512, %v563, inf
        %v593 = vsel %vm512, %v564, inf
        %v594 = vmin.f32 %v592, %v593
        %v595 = vrot.slane %v594, 4
        %v596 = vmin.f32 %v594, %v595
        %v597 = vrot.slane %v596, 2
        %v598 = vmin.f32 %v596, %v597
        %v599 = vrot.slane %v598, 1
        %v600 = vmin.f32 %v598, %v599
        %vm601 = vcmp.eq.f32.partialorder %v325, %v573
        %vm602 = vcmp.eq.f32.partialorder %v326, %v573
        %vm603 = vcmp.eq.f32.partialorder %v325, %v582
        %vm604 = vcmp.eq.f32.partialorder %v326, %v582
        %vm605 = vcmp.eq.f32.partialorder %v325, %v591
        %vm606 = vcmp.eq.f32.partialorder %v326, %v591
        %vm607 = vcmp.eq.f32.partialorder %v325, %v600
        %vm608 = vcmp.eq.f32.partialorder %v326, %v600
        %v609 = vsel %vm601, 1, 0
        %v610 = vsel %vm602, 1, 0
        %v611 = vsel %vm603, 1, 0
        %v612 = vsel %vm604, 1, 0
        %v613 = vsel %vm605, 1, 0
        %v614 = vsel %vm606, 1, 0
        %v615 = vsel %vm607, 1, 0
        %v616 = vsel %vm608, 1, 0
        %v617 = vcvt.s32.f32 %v609
        %v618 = vcvt.s32.f32 %v610
        %v619 = vcvt.s32.f32 %v611
        %v620 = vcvt.s32.f32 %v612
        %v621 = vcvt.s32.f32 %v613
        %v622 = vcvt.s32.f32 %v614
        %v623 = vcvt.s32.f32 %v615
        %v624 = vcvt.s32.f32 %v616
        %vm625 = vcmask 130048
        %v627 = vsel %vm625, %v335, 0
        %629 = vmatpush.msra.mxu0 0.0
        %630 = vmatpush.msra.mxu0 0.0
        %631 = vmatpush.msra.mxu0 0.0
        %632 = vmatpush.msra.mxu0 0.0
        %633 = vmatpush.msra.mxu0 0.0
        %634 = vmatpush.msra.mxu0 0.0
        %635 = vmatpush.msra.mxu0 0.0
        %636 = vmatpush.msra.mxu0 0.0
        %637 = vmatpush.msra.mxu0 0.0
        %638 = vmatpush.msra.mxu0 0.0
        %639 = vmatpush.msra.mxu0 0.0
        %640 = vmatpush.msra.mxu0 0.0
        %641 = vmatpush.msra.mxu0 0.0
        %642 = vmatpush.msra.mxu0 0.0
        %643 = vmatpush.msra.mxu0 %v618
        %644 = vmatpush.msra.mxu0 %v617
        %645 = vmatmul.f32.gmra.mxu0 %v627
        %v646 = vpop.f32.mrf.mxu0
        %v647 = vadd.f32 0.0, %v646
        %648 = vdwg.mxu0
        %v650 = vsel %vm625, %v336, 0
        %652 = vmatpush.msra.mxu0 0.0
        %653 = vmatpush.msra.mxu0 0.0
        %654 = vmatpush.msra.mxu0 0.0
        %655 = vmatpush.msra.mxu0 0.0
        %656 = vmatpush.msra.mxu0 0.0
        %657 = vmatpush.msra.mxu0 0.0
        %658 = vmatpush.msra.mxu0 0.0
        %659 = vmatpush.msra.mxu0 0.0
        %660 = vmatpush.msra.mxu0 0.0
        %661 = vmatpush.msra.mxu0 0.0
        %662 = vmatpush.msra.mxu0 0.0
        %663 = vmatpush.msra.mxu0 0.0
        %664 = vmatpush.msra.mxu0 0.0
        %665 = vmatpush.msra.mxu0 0.0
        %666 = vmatpush.msra.mxu0 %v620
        %667 = vmatpush.msra.mxu0 %v619
        %668 = vmatmul.f32.gmra.mxu0 %v650
        %v669 = vpop.f32.mrf.mxu0
        %v670 = vadd.f32 0.0, %v669
        %671 = vdwg.mxu0
        %v673 = vsel %vm625, %v337, 0
        %675 = vmatpush.msra.mxu0 0.0
        %676 = vmatpush.msra.mxu0 0.0
        %677 = vmatpush.msra.mxu0 0.0
        %678 = vmatpush.msra.mxu0 0.0
        %679 = vmatpush.msra.mxu0 0.0
        %680 = vmatpush.msra.mxu0 0.0
        %681 = vmatpush.msra.mxu0 0.0
        %682 = vmatpush.msra.mxu0 0.0
        %683 = vmatpush.msra.mxu0 0.0
        %684 = vmatpush.msra.mxu0 0.0
        %685 = vmatpush.msra.mxu0 0.0
        %686 = vmatpush.msra.mxu0 0.0
        %687 = vmatpush.msra.mxu0 0.0
        %688 = vmatpush.msra.mxu0 0.0
        %689 = vmatpush.msra.mxu0 %v622
        %690 = vmatpush.msra.mxu0 %v621
        %691 = vmatmul.f32.gmra.mxu0 %v673
        %v692 = vpop.f32.mrf.mxu0
        %v693 = vadd.f32 0.0, %v692
        %694 = vdwg.mxu0
        %v696 = vsel %vm625, %v338, 0
        %698 = vmatpush.msra.mxu0 0.0
        %699 = vmatpush.msra.mxu0 0.0
        %700 = vmatpush.msra.mxu0 0.0
        %701 = vmatpush.msra.mxu0 0.0
        %702 = vmatpush.msra.mxu0 0.0
        %703 = vmatpush.msra.mxu0 0.0
        %704 = vmatpush.msra.mxu0 0.0
        %705 = vmatpush.msra.mxu0 0.0
        %706 = vmatpush.msra.mxu0 0.0
        %707 = vmatpush.msra.mxu0 0.0
        %708 = vmatpush.msra.mxu0 0.0
        %709 = vmatpush.msra.mxu0 0.0
        %710 = vmatpush.msra.mxu0 0.0
        %711 = vmatpush.msra.mxu0 0.0
        %712 = vmatpush.msra.mxu0 %v624
        %713 = vmatpush.msra.mxu0 %v623
        %714 = vmatmul.f32.gmra.mxu0 %v696
        %v715 = vpop.f32.mrf.mxu0
        %v716 = vadd.f32 0.0, %v715
        %717 = vdwg.mxu0
        %v718 = vsub.f32 %v647, %v318
        %v719 = vsub.f32 %v670, %v319
        %v720 = vsub.f32 %v693, %v320
        %v721 = vsub.f32 %v716, %v321
        %v722 = vmul.f32 %v718, %v718
        %v723 = vmul.f32 %v719, %v719
        %v724 = vmul.f32 %v720, %v720
        %v725 = vmul.f32 %v721, %v721
        %v726 = vsel %vm512, %v722, 0.0
        %v727 = vrot.slane %v726, 4
        %v728 = vadd.f32 %v726, %v727
        %v729 = vrot.slane %v728, 2
        %v730 = vadd.f32 %v728, %v729
        %v731 = vrot.slane %v730, 1
        %v732 = vadd.f32 %v730, %v731
        %v733 = vsel %vm512, %v723, 0.0
        %v734 = vrot.slane %v733, 4
        %v735 = vadd.f32 %v733, %v734
        %v736 = vrot.slane %v735, 2
        %v737 = vadd.f32 %v735, %v736
        %v738 = vrot.slane %v737, 1
        %v739 = vadd.f32 %v737, %v738
        %v740 = vsel %vm512, %v724, 0.0
        %v741 = vrot.slane %v740, 4
        %v742 = vadd.f32 %v740, %v741
        %v743 = vrot.slane %v742, 2
        %v744 = vadd.f32 %v742, %v743
        %v745 = vrot.slane %v744, 1
        %v746 = vadd.f32 %v744, %v745
        %v747 = vsel %vm512, %v725, 0.0
        %v748 = vrot.slane %v747, 4
        %v749 = vadd.f32 %v747, %v748
        %v750 = vrot.slane %v749, 2
        %v751 = vadd.f32 %v749, %v750
        %v752 = vrot.slane %v751, 1
        %v753 = vadd.f32 %v751, %v752
        %v754 = vsel %vm512, %v732, 0.0
        %755 = vadd.xlane.f32.xlu0 %v754
        %v756 = vpop.xlane.xlu0 %755
        %v757 = vsel %vm512, %v739, 0.0
        %758 = vadd.xlane.f32.xlu0 %v757
        %v759 = vpop.xlane.xlu0 %758
        %v760 = vsel %vm512, %v746, 0.0
        %761 = vadd.xlane.f32.xlu0 %v760
        %v762 = vpop.xlane.xlu0 %761
        %v763 = vsel %vm512, %v753, 0.0
        %764 = vadd.xlane.f32.xlu0 %v763
        %v765 = vpop.xlane.xlu0 %764
        %v766 = vsel %vm512, %v617, 0.0
        %767 = vadd.xlane.f32.xlu0 %v766
        %v768 = vpop.xlane.xlu0 %767
        %v769 = vsel %vm512, %v618, 0.0
        %770 = vadd.xlane.f32.xlu0 %v769
        %v771 = vpop.xlane.xlu0 %770
        %v772 = vsel %vm512, %v619, 0.0
        %773 = vadd.xlane.f32.xlu0 %v772
        %v774 = vpop.xlane.xlu0 %773
        %v775 = vsel %vm512, %v620, 0.0
        %776 = vadd.xlane.f32.xlu0 %v775
        %v777 = vpop.xlane.xlu0 %776
        %v778 = vsel %vm512, %v621, 0.0
        %779 = vadd.xlane.f32.xlu0 %v778
        %v780 = vpop.xlane.xlu0 %779
        %v781 = vsel %vm512, %v622, 0.0
        %782 = vadd.xlane.f32.xlu0 %v781
        %v783 = vpop.xlane.xlu0 %782
        %v784 = vsel %vm512, %v623, 0.0
        %785 = vadd.xlane.f32.xlu0 %v784
        %v786 = vpop.xlane.xlu0 %785
        %v787 = vsel %vm512, %v624, 0.0
        %788 = vadd.xlane.f32.xlu0 %v787
        %v789 = vpop.xlane.xlu0 %788
        %v790 = vadd.f32 %v647, 0.0
        %v791 = vadd.f32 %v670, 0.0
        %v792 = vadd.f32 %v693, 0.0
        %v793 = vadd.f32 %v716, 0.0
        %v794 = vsub.f32 %v318, %v647
        %v795 = vsub.f32 %v319, %v670
        %v796 = vsub.f32 %v320, %v693
        %v797 = vsub.f32 %v321, %v716
        %s798 = scalar_lea.vmem %s1, 64
        %v799 = vld [vmem:[%s798] sm:$0xff]
        %v800 = vld [vmem:[%s798 + $0x8] sm:$0xff]
        %v801 = vld [vmem:[%s798 + $0x10] sm:$0xff]
        %v802 = vld [vmem:[%s798 + $0x18] sm:$0xff]
        %v803 = vld [vmem:[%s798 + $0x20] sm:$0xff]
        %v804 = vld [vmem:[%s798 + $0x28] sm:$0xff]
        %v805 = vld [vmem:[%s798 + $0x30] sm:$0xff]
        %v806 = vld [vmem:[%s798 + $0x38] sm:$0xff]
        %s807 = scalar_lea.vmem %s2, 32
        %v808 = vld [vmem:[%s807] sm:$0xff]
        %v809 = vld [vmem:[%s807 + $0x8] sm:$0xff]
        %v810 = vld [vmem:[%s807 + $0x10] sm:$0xff]
        %v811 = vld [vmem:[%s807 + $0x18] sm:$0xff]
        %s812 = scalar_lea.vmem %s3, 64
        %v813 = vld [vmem:[%s812] sm:$0xff]
        %v814 = vld [vmem:[%s812 + $0x8] sm:$0xff]
        %v815 = vld [vmem:[%s812 + $0x10] sm:$0xff]
        %v816 = vld [vmem:[%s812 + $0x18] sm:$0xff]
        %v817 = vld [vmem:[%s812 + $0x20] sm:$0xff]
        %v818 = vld [vmem:[%s812 + $0x28] sm:$0xff]
        %v819 = vld [vmem:[%s812 + $0x30] sm:$0xff]
        %v820 = vld [vmem:[%s812 + $0x38] sm:$0xff]
        %v822 = vsel %vm347, %v799, 0
        %v825 = vsel %vm347, %v800, 0
        %827 = vmatpush.msra.mxu0 0.0
        %828 = vmatpush.msra.mxu0 0.0
        %829 = vmatpush.msra.mxu0 0.0
        %830 = vmatpush.msra.mxu0 0.0
        %831 = vmatpush.msra.mxu0 0.0
        %832 = vmatpush.msra.mxu0 0.0
        %833 = vmatpush.msra.mxu0 0.0
        %834 = vmatpush.msra.mxu0 0.0
        %835 = vmatpush.msra.mxu0 0.0
        %836 = vmatpush.msra.mxu0 0.0
        %837 = vmatpush.msra.mxu0 0.0
        %838 = vmatpush.msra.mxu0 0.0
        %839 = vmatpush.msra.mxu0 0.0
        %840 = vmatpush.msra.mxu0 0.0
        %841 = vmatpush.msra.mxu0 0.0
        %842 = vmatpush.msra.mxu0 %v794
        %843 = vmatmul.f32.gmra.mxu0 %v822
        %v844 = vpop.f32.mrf.mxu0
        %v845 = vadd.f32 0.0, %v844
        %846 = vmatmul.f32.gmra.mxu0 %v825
        %v847 = vpop.f32.mrf.mxu0
        %v848 = vadd.f32 0.0, %v847
        %849 = vdwg.mxu0
        %v851 = vsel %vm347, %v801, 0
        %v854 = vsel %vm347, %v802, 0
        %856 = vmatpush.msra.mxu0 0.0
        %857 = vmatpush.msra.mxu0 0.0
        %858 = vmatpush.msra.mxu0 0.0
        %859 = vmatpush.msra.mxu0 0.0
        %860 = vmatpush.msra.mxu0 0.0
        %861 = vmatpush.msra.mxu0 0.0
        %862 = vmatpush.msra.mxu0 0.0
        %863 = vmatpush.msra.mxu0 0.0
        %864 = vmatpush.msra.mxu0 0.0
        %865 = vmatpush.msra.mxu0 0.0
        %866 = vmatpush.msra.mxu0 0.0
        %867 = vmatpush.msra.mxu0 0.0
        %868 = vmatpush.msra.mxu0 0.0
        %869 = vmatpush.msra.mxu0 0.0
        %870 = vmatpush.msra.mxu0 0.0
        %871 = vmatpush.msra.mxu0 %v795
        %872 = vmatmul.f32.gmra.mxu0 %v851
        %v873 = vpop.f32.mrf.mxu0
        %v874 = vadd.f32 0.0, %v873
        %875 = vmatmul.f32.gmra.mxu0 %v854
        %v876 = vpop.f32.mrf.mxu0
        %v877 = vadd.f32 0.0, %v876
        %878 = vdwg.mxu0
        %v880 = vsel %vm347, %v803, 0
        %v883 = vsel %vm347, %v804, 0
        %885 = vmatpush.msra.mxu0 0.0
        %886 = vmatpush.msra.mxu0 0.0
        %887 = vmatpush.msra.mxu0 0.0
        %888 = vmatpush.msra.mxu0 0.0
        %889 = vmatpush.msra.mxu0 0.0
        %890 = vmatpush.msra.mxu0 0.0
        %891 = vmatpush.msra.mxu0 0.0
        %892 = vmatpush.msra.mxu0 0.0
        %893 = vmatpush.msra.mxu0 0.0
        %894 = vmatpush.msra.mxu0 0.0
        %895 = vmatpush.msra.mxu0 0.0
        %896 = vmatpush.msra.mxu0 0.0
        %897 = vmatpush.msra.mxu0 0.0
        %898 = vmatpush.msra.mxu0 0.0
        %899 = vmatpush.msra.mxu0 0.0
        %900 = vmatpush.msra.mxu0 %v796
        %901 = vmatmul.f32.gmra.mxu0 %v880
        %v902 = vpop.f32.mrf.mxu0
        %v903 = vadd.f32 0.0, %v902
        %904 = vmatmul.f32.gmra.mxu0 %v883
        %v905 = vpop.f32.mrf.mxu0
        %v906 = vadd.f32 0.0, %v905
        %907 = vdwg.mxu0
        %v909 = vsel %vm347, %v805, 0
        %v912 = vsel %vm347, %v806, 0
        %914 = vmatpush.msra.mxu0 0.0
        %915 = vmatpush.msra.mxu0 0.0
        %916 = vmatpush.msra.mxu0 0.0
        %917 = vmatpush.msra.mxu0 0.0
        %918 = vmatpush.msra.mxu0 0.0
        %919 = vmatpush.msra.mxu0 0.0
        %920 = vmatpush.msra.mxu0 0.0
        %921 = vmatpush.msra.mxu0 0.0
        %922 = vmatpush.msra.mxu0 0.0
        %923 = vmatpush.msra.mxu0 0.0
        %924 = vmatpush.msra.mxu0 0.0
        %925 = vmatpush.msra.mxu0 0.0
        %926 = vmatpush.msra.mxu0 0.0
        %927 = vmatpush.msra.mxu0 0.0
        %928 = vmatpush.msra.mxu0 0.0
        %929 = vmatpush.msra.mxu0 %v797
        %930 = vmatmul.f32.gmra.mxu0 %v909
        %v931 = vpop.f32.mrf.mxu0
        %v932 = vadd.f32 0.0, %v931
        %933 = vmatmul.f32.gmra.mxu0 %v912
        %v934 = vpop.f32.mrf.mxu0
        %v935 = vadd.f32 0.0, %v934
        %936 = vdwg.mxu0
        %938 = vset.pattern.permute.xlu0 0
        %939 = vperm.xlu0 %938, %v813
        %v940 = vpop.permute.xlu0 %939
        %943 = vset.pattern.permute.xlu0 0
        %944 = vperm.xlu0 %943, %v814
        %v945 = vpop.permute.xlu0 %944
        %948 = vset.pattern.permute.xlu0 0
        %949 = vperm.xlu0 %948, %v815
        %v950 = vpop.permute.xlu0 %949
        %953 = vset.pattern.permute.xlu0 0
        %954 = vperm.xlu0 %953, %v816
        %v955 = vpop.permute.xlu0 %954
        %958 = vset.pattern.permute.xlu0 0
        %959 = vperm.xlu0 %958, %v817
        %v960 = vpop.permute.xlu0 %959
        %963 = vset.pattern.permute.xlu0 0
        %964 = vperm.xlu0 %963, %v818
        %v965 = vpop.permute.xlu0 %964
        %968 = vset.pattern.permute.xlu0 0
        %969 = vperm.xlu0 %968, %v819
        %v970 = vpop.permute.xlu0 %969
        %973 = vset.pattern.permute.xlu0 0
        %974 = vperm.xlu0 %973, %v820
        %v975 = vpop.permute.xlu0 %974
        %v977 = vsub.f32 %v845, %v940
        %v978 = vsub.f32 %v848, %v945
        %v979 = vsub.f32 %v874, %v950
        %v980 = vsub.f32 %v877, %v955
        %v981 = vsub.f32 %v903, %v960
        %v982 = vsub.f32 %v906, %v965
        %v983 = vsub.f32 %v932, %v970
        %v984 = vsub.f32 %v935, %v975
        %v985 = vsel %vm512, %v977, -inf
        %v986 = vsel %vm512, %v978, -inf
        %v987 = vmax.f32 %v985, %v986
        %v988 = vrot.slane %v987, 4
        %v989 = vmax.f32 %v987, %v988
        %v990 = vrot.slane %v989, 2
        %v991 = vmax.f32 %v989, %v990
        %v992 = vrot.slane %v991, 1
        %v993 = vmax.f32 %v991, %v992
        %v994 = vsel %vm512, %v979, -inf
        %v995 = vsel %vm512, %v980, -inf
        %v996 = vmax.f32 %v994, %v995
        %v997 = vrot.slane %v996, 4
        %v998 = vmax.f32 %v996, %v997
        %v999 = vrot.slane %v998, 2
        %v1000 = vmax.f32 %v998, %v999
        %v1001 = vrot.slane %v1000, 1
        %v1002 = vmax.f32 %v1000, %v1001
        %v1003 = vsel %vm512, %v981, -inf
        %v1004 = vsel %vm512, %v982, -inf
        %v1005 = vmax.f32 %v1003, %v1004
        %v1006 = vrot.slane %v1005, 4
        %v1007 = vmax.f32 %v1005, %v1006
        %v1008 = vrot.slane %v1007, 2
        %v1009 = vmax.f32 %v1007, %v1008
        %v1010 = vrot.slane %v1009, 1
        %v1011 = vmax.f32 %v1009, %v1010
        %v1012 = vsel %vm512, %v983, -inf
        %v1013 = vsel %vm512, %v984, -inf
        %v1014 = vmax.f32 %v1012, %v1013
        %v1015 = vrot.slane %v1014, 4
        %v1016 = vmax.f32 %v1014, %v1015
        %v1017 = vrot.slane %v1016, 2
        %v1018 = vmax.f32 %v1016, %v1017
        %v1019 = vrot.slane %v1018, 1
        %v1020 = vmax.f32 %v1018, %v1019
        %vm1021 = vcmp.ge.f32.partialorder %v977, %v993
        %vm1022 = vcmp.ge.f32.partialorder %v978, %v993
        %vm1023 = vcmp.ge.f32.partialorder %v979, %v1002
        %vm1024 = vcmp.ge.f32.partialorder %v980, %v1002
        %vm1025 = vcmp.ge.f32.partialorder %v981, %v1011
        %vm1026 = vcmp.ge.f32.partialorder %v982, %v1011
        %vm1027 = vcmp.ge.f32.partialorder %v983, %v1020
        %vm1028 = vcmp.ge.f32.partialorder %v984, %v1020
        %v1029 = vsel %vm1021, %v325, 16.0
        %v1030 = vsel %vm1022, %v326, 16.0
        %v1031 = vsel %vm1023, %v325, 16.0
        %v1032 = vsel %vm1024, %v326, 16.0
        %v1033 = vsel %vm1025, %v325, 16.0
        %v1034 = vsel %vm1026, %v326, 16.0
        %v1035 = vsel %vm1027, %v325, 16.0
        %v1036 = vsel %vm1028, %v326, 16.0
        %v1037 = vsel %vm512, %v1029, inf
        %v1038 = vsel %vm512, %v1030, inf
        %v1039 = vmin.f32 %v1037, %v1038
        %v1040 = vrot.slane %v1039, 4
        %v1041 = vmin.f32 %v1039, %v1040
        %v1042 = vrot.slane %v1041, 2
        %v1043 = vmin.f32 %v1041, %v1042
        %v1044 = vrot.slane %v1043, 1
        %v1045 = vmin.f32 %v1043, %v1044
        %v1046 = vsel %vm512, %v1031, inf
        %v1047 = vsel %vm512, %v1032, inf
        %v1048 = vmin.f32 %v1046, %v1047
        %v1049 = vrot.slane %v1048, 4
        %v1050 = vmin.f32 %v1048, %v1049
        %v1051 = vrot.slane %v1050, 2
        %v1052 = vmin.f32 %v1050, %v1051
        %v1053 = vrot.slane %v1052, 1
        %v1054 = vmin.f32 %v1052, %v1053
        %v1055 = vsel %vm512, %v1033, inf
        %v1056 = vsel %vm512, %v1034, inf
        %v1057 = vmin.f32 %v1055, %v1056
        %v1058 = vrot.slane %v1057, 4
        %v1059 = vmin.f32 %v1057, %v1058
        %v1060 = vrot.slane %v1059, 2
        %v1061 = vmin.f32 %v1059, %v1060
        %v1062 = vrot.slane %v1061, 1
        %v1063 = vmin.f32 %v1061, %v1062
        %v1064 = vsel %vm512, %v1035, inf
        %v1065 = vsel %vm512, %v1036, inf
        %v1066 = vmin.f32 %v1064, %v1065
        %v1067 = vrot.slane %v1066, 4
        %v1068 = vmin.f32 %v1066, %v1067
        %v1069 = vrot.slane %v1068, 2
        %v1070 = vmin.f32 %v1068, %v1069
        %v1071 = vrot.slane %v1070, 1
        %v1072 = vmin.f32 %v1070, %v1071
        %vm1073 = vcmp.eq.f32.partialorder %v325, %v1045
        %vm1074 = vcmp.eq.f32.partialorder %v326, %v1045
        %vm1075 = vcmp.eq.f32.partialorder %v325, %v1054
        %vm1076 = vcmp.eq.f32.partialorder %v326, %v1054
        %vm1077 = vcmp.eq.f32.partialorder %v325, %v1063
        %vm1078 = vcmp.eq.f32.partialorder %v326, %v1063
        %vm1079 = vcmp.eq.f32.partialorder %v325, %v1072
        %vm1080 = vcmp.eq.f32.partialorder %v326, %v1072
        %v1081 = vsel %vm1073, 1, 0
        %v1082 = vsel %vm1074, 1, 0
        %v1083 = vsel %vm1075, 1, 0
        %v1084 = vsel %vm1076, 1, 0
        %v1085 = vsel %vm1077, 1, 0
        %v1086 = vsel %vm1078, 1, 0
        %v1087 = vsel %vm1079, 1, 0
        %v1088 = vsel %vm1080, 1, 0
        %v1089 = vcvt.s32.f32 %v1081
        %v1090 = vcvt.s32.f32 %v1082
        %v1091 = vcvt.s32.f32 %v1083
        %v1092 = vcvt.s32.f32 %v1084
        %v1093 = vcvt.s32.f32 %v1085
        %v1094 = vcvt.s32.f32 %v1086
        %v1095 = vcvt.s32.f32 %v1087
        %v1096 = vcvt.s32.f32 %v1088
        %v1098 = vsel %vm625, %v808, 0
        %1100 = vmatpush.msra.mxu0 0.0
        %1101 = vmatpush.msra.mxu0 0.0
        %1102 = vmatpush.msra.mxu0 0.0
        %1103 = vmatpush.msra.mxu0 0.0
        %1104 = vmatpush.msra.mxu0 0.0
        %1105 = vmatpush.msra.mxu0 0.0
        %1106 = vmatpush.msra.mxu0 0.0
        %1107 = vmatpush.msra.mxu0 0.0
        %1108 = vmatpush.msra.mxu0 0.0
        %1109 = vmatpush.msra.mxu0 0.0
        %1110 = vmatpush.msra.mxu0 0.0
        %1111 = vmatpush.msra.mxu0 0.0
        %1112 = vmatpush.msra.mxu0 0.0
        %1113 = vmatpush.msra.mxu0 0.0
        %1114 = vmatpush.msra.mxu0 %v1090
        %1115 = vmatpush.msra.mxu0 %v1089
        %1116 = vmatmul.f32.gmra.mxu0 %v1098
        %v1117 = vpop.f32.mrf.mxu0
        %v1118 = vadd.f32 0.0, %v1117
        %1119 = vdwg.mxu0
        %v1121 = vsel %vm625, %v809, 0
        %1123 = vmatpush.msra.mxu0 0.0
        %1124 = vmatpush.msra.mxu0 0.0
        %1125 = vmatpush.msra.mxu0 0.0
        %1126 = vmatpush.msra.mxu0 0.0
        %1127 = vmatpush.msra.mxu0 0.0
        %1128 = vmatpush.msra.mxu0 0.0
        %1129 = vmatpush.msra.mxu0 0.0
        %1130 = vmatpush.msra.mxu0 0.0
        %1131 = vmatpush.msra.mxu0 0.0
        %1132 = vmatpush.msra.mxu0 0.0
        %1133 = vmatpush.msra.mxu0 0.0
        %1134 = vmatpush.msra.mxu0 0.0
        %1135 = vmatpush.msra.mxu0 0.0
        %1136 = vmatpush.msra.mxu0 0.0
        %1137 = vmatpush.msra.mxu0 %v1092
        %1138 = vmatpush.msra.mxu0 %v1091
        %1139 = vmatmul.f32.gmra.mxu0 %v1121
        %v1140 = vpop.f32.mrf.mxu0
        %v1141 = vadd.f32 0.0, %v1140
        %1142 = vdwg.mxu0
        %v1144 = vsel %vm625, %v810, 0
        %1146 = vmatpush.msra.mxu0 0.0
        %1147 = vmatpush.msra.mxu0 0.0
        %1148 = vmatpush.msra.mxu0 0.0
        %1149 = vmatpush.msra.mxu0 0.0
        %1150 = vmatpush.msra.mxu0 0.0
        %1151 = vmatpush.msra.mxu0 0.0
        %1152 = vmatpush.msra.mxu0 0.0
        %1153 = vmatpush.msra.mxu0 0.0
        %1154 = vmatpush.msra.mxu0 0.0
        %1155 = vmatpush.msra.mxu0 0.0
        %1156 = vmatpush.msra.mxu0 0.0
        %1157 = vmatpush.msra.mxu0 0.0
        %1158 = vmatpush.msra.mxu0 0.0
        %1159 = vmatpush.msra.mxu0 0.0
        %1160 = vmatpush.msra.mxu0 %v1094
        %1161 = vmatpush.msra.mxu0 %v1093
        %1162 = vmatmul.f32.gmra.mxu0 %v1144
        %v1163 = vpop.f32.mrf.mxu0
        %v1164 = vadd.f32 0.0, %v1163
        %1165 = vdwg.mxu0
        %v1167 = vsel %vm625, %v811, 0
        %1169 = vmatpush.msra.mxu0 0.0
        %1170 = vmatpush.msra.mxu0 0.0
        %1171 = vmatpush.msra.mxu0 0.0
        %1172 = vmatpush.msra.mxu0 0.0
        %1173 = vmatpush.msra.mxu0 0.0
        %1174 = vmatpush.msra.mxu0 0.0
        %1175 = vmatpush.msra.mxu0 0.0
        %1176 = vmatpush.msra.mxu0 0.0
        %1177 = vmatpush.msra.mxu0 0.0
        %1178 = vmatpush.msra.mxu0 0.0
        %1179 = vmatpush.msra.mxu0 0.0
        %1180 = vmatpush.msra.mxu0 0.0
        %1181 = vmatpush.msra.mxu0 0.0
        %1182 = vmatpush.msra.mxu0 0.0
        %1183 = vmatpush.msra.mxu0 %v1096
        %1184 = vmatpush.msra.mxu0 %v1095
        %1185 = vmatmul.f32.gmra.mxu0 %v1167
        %v1186 = vpop.f32.mrf.mxu0
        %v1187 = vadd.f32 0.0, %v1186
        %1188 = vdwg.mxu0
        %v1189 = vsub.f32 %v1118, %v794
        %v1190 = vsub.f32 %v1141, %v795
        %v1191 = vsub.f32 %v1164, %v796
        %v1192 = vsub.f32 %v1187, %v797
        %v1193 = vmul.f32 %v1189, %v1189
        %v1194 = vmul.f32 %v1190, %v1190
        %v1195 = vmul.f32 %v1191, %v1191
        %v1196 = vmul.f32 %v1192, %v1192
        %v1197 = vsel %vm512, %v1193, 0.0
        %v1198 = vrot.slane %v1197, 4
        %v1199 = vadd.f32 %v1197, %v1198
        %v1200 = vrot.slane %v1199, 2
        %v1201 = vadd.f32 %v1199, %v1200
        %v1202 = vrot.slane %v1201, 1
        %v1203 = vadd.f32 %v1201, %v1202
        %v1204 = vsel %vm512, %v1194, 0.0
        %v1205 = vrot.slane %v1204, 4
        %v1206 = vadd.f32 %v1204, %v1205
        %v1207 = vrot.slane %v1206, 2
        %v1208 = vadd.f32 %v1206, %v1207
        %v1209 = vrot.slane %v1208, 1
        %v1210 = vadd.f32 %v1208, %v1209
        %v1211 = vsel %vm512, %v1195, 0.0
        %v1212 = vrot.slane %v1211, 4
        %v1213 = vadd.f32 %v1211, %v1212
        %v1214 = vrot.slane %v1213, 2
        %v1215 = vadd.f32 %v1213, %v1214
        %v1216 = vrot.slane %v1215, 1
        %v1217 = vadd.f32 %v1215, %v1216
        %v1218 = vsel %vm512, %v1196, 0.0
        %v1219 = vrot.slane %v1218, 4
        %v1220 = vadd.f32 %v1218, %v1219
        %v1221 = vrot.slane %v1220, 2
        %v1222 = vadd.f32 %v1220, %v1221
        %v1223 = vrot.slane %v1222, 1
        %v1224 = vadd.f32 %v1222, %v1223
        %v1225 = vsel %vm512, %v1203, 0.0
        %1226 = vadd.xlane.f32.xlu0 %v1225
        %v1227 = vpop.xlane.xlu0 %1226
        %v1228 = vsel %vm512, %v1210, 0.0
        %1229 = vadd.xlane.f32.xlu0 %v1228
        %v1230 = vpop.xlane.xlu0 %1229
        %v1231 = vsel %vm512, %v1217, 0.0
        %1232 = vadd.xlane.f32.xlu0 %v1231
        %v1233 = vpop.xlane.xlu0 %1232
        %v1234 = vsel %vm512, %v1224, 0.0
        %1235 = vadd.xlane.f32.xlu0 %v1234
        %v1236 = vpop.xlane.xlu0 %1235
        %v1237 = vsel %vm512, %v1089, 0.0
        %1238 = vadd.xlane.f32.xlu0 %v1237
        %v1239 = vpop.xlane.xlu0 %1238
        %v1240 = vsel %vm512, %v1090, 0.0
        %1241 = vadd.xlane.f32.xlu0 %v1240
        %v1242 = vpop.xlane.xlu0 %1241
        %v1243 = vsel %vm512, %v1091, 0.0
        %1244 = vadd.xlane.f32.xlu0 %v1243
        %v1245 = vpop.xlane.xlu0 %1244
        %v1246 = vsel %vm512, %v1092, 0.0
        %1247 = vadd.xlane.f32.xlu0 %v1246
        %v1248 = vpop.xlane.xlu0 %1247
        %v1249 = vsel %vm512, %v1093, 0.0
        %1250 = vadd.xlane.f32.xlu0 %v1249
        %v1251 = vpop.xlane.xlu0 %1250
        %v1252 = vsel %vm512, %v1094, 0.0
        %1253 = vadd.xlane.f32.xlu0 %v1252
        %v1254 = vpop.xlane.xlu0 %1253
        %v1255 = vsel %vm512, %v1095, 0.0
        %1256 = vadd.xlane.f32.xlu0 %v1255
        %v1257 = vpop.xlane.xlu0 %1256
        %v1258 = vsel %vm512, %v1096, 0.0
        %1259 = vadd.xlane.f32.xlu0 %v1258
        %v1260 = vpop.xlane.xlu0 %1259
        %v1261 = vadd.f32 %v790, %v1118
        %v1262 = vadd.f32 %v791, %v1141
        %v1263 = vadd.f32 %v792, %v1164
        %v1264 = vadd.f32 %v793, %v1187
        %1265 = vst.msk [vmem:[%s271] sm:$0xff] %vm512, %v1261
        %1266 = vst.msk [vmem:[%s271 + $0x8] sm:$0xff] %vm512, %v1262
        %1267 = vst.msk [vmem:[%s271 + $0x10] sm:$0xff] %vm512, %v1263
        %1268 = vst.msk [vmem:[%s271 + $0x18] sm:$0xff] %vm512, %v1264
        %vm1269 = vcmask 7168
        %v1270 = vsel %vm1269, %v756, %v1227
        %v1271 = vsel %vm1269, %v759, %v1230
        %v1272 = vsel %vm1269, %v762, %v1233
        %v1273 = vsel %vm1269, %v765, %v1236
        %vm1274 = vcmask 8192
        %1275 = vst.msk [vmem:[%s308] sm:$0x1] %vm1274, %v1270
        %1276 = vst.msk [vmem:[%s308 + $0x1] sm:$0x1] %vm1274, %v1271
        %1277 = vst.msk [vmem:[%s308 + $0x2] sm:$0x1] %vm1274, %v1272
        %1278 = vst.msk [vmem:[%s308 + $0x3] sm:$0x1] %vm1274, %v1273
        %v1279 = vsel %vm1269, %v768, %v1239
        %v1280 = vsel %vm1269, %v771, %v1242
        %v1281 = vsel %vm1269, %v774, %v1245
        %v1282 = vsel %vm1269, %v777, %v1248
        %v1283 = vsel %vm1269, %v780, %v1251
        %v1284 = vsel %vm1269, %v783, %v1254
        %v1285 = vsel %vm1269, %v786, %v1257
        %v1286 = vsel %vm1269, %v789, %v1260
        %vm1287 = vcmask 15360
        %1288 = vst.msk [vmem:[%s317] sm:$0xff] %vm1287, %v1279
        %1289 = vst.msk [vmem:[%s317 + $0x8] sm:$0xff] %vm1287, %v1280
        %1290 = vst.msk [vmem:[%s317 + $0x10] sm:$0xff] %vm1287, %v1281
        %1291 = vst.msk [vmem:[%s317 + $0x18] sm:$0xff] %vm1287, %v1282
        %1292 = vst.msk [vmem:[%s317 + $0x20] sm:$0xff] %vm1287, %v1283
        %1293 = vst.msk [vmem:[%s317 + $0x28] sm:$0xff] %vm1287, %v1284
        %1294 = vst.msk [vmem:[%s317 + $0x30] sm:$0xff] %vm1287, %v1285
        %1295 = vst.msk [vmem:[%s317 + $0x38] sm:$0xff] %vm1287, %v1286
        %s1296 = sand.u32 %s134, 1
        %s1297 = scalar_lea.sflag [#allocation3], %s1296
        %s1298 = sand.u32 %s134, 1
        %s1299 = smul.addr %s1298, 32
        %s1300 = scalar_lea.vmem [#allocation2], %s1299
        %p1301 = scmp.lt.s32.totalorder %s25, 1
        %s1302 = scalar_select %p1301, %s25, 1
        %p1303 = scmp.lt.s32.totalorder %s26, 0
        %s1304 = scalar_select %p1303, %s26, 0
        %s1305 = smul.addr %s1304, 4
        %s1306 = smul.addr %s1302, 4
        %s1307 = sadd.s32 %s1305, %s1306
        %s1308 = scalar_lea.vmem %s5, %s1307
        %p1309 = scmp.lt.s32.totalorder %s25, 1
        %s1310 = scalar_select %p1309, %s25, 1
        %p1311 = scmp.lt.s32.totalorder %s26, 0
        %s1312 = scalar_select %p1311, %s26, 0
        %s1313 = smul.addr %s1312, 8
        %s1314 = smul.addr %s1310, 8
        %s1315 = sadd.s32 %s1313, %s1314
        %s1316 = smul.addr %s1315, 8
        %s1317 = scalar_lea.vmem %s6, %s1316
        // Predicated region
        $region37: #{tpu_custom_call.1} parent=35 // pred_check
          %p1318 = pneg %p144
        $region38: #{tpu_custom_call.1} parent=35 // pred_check_branch
          %1320 = sbr.rel (%p1318) target = $region40
        $region39: #{tpu_custom_call.1} parent=35 // pred_region
          %1322 = vsyncadd %s1297, 0
          %s1323 = smul.addr %s25, 4
          %s1324 = sadd.s32 %s26, %s1323
          %s1325 = smul.addr %s1324, 8
          %s1326 = scalar_lea.hbm %s4, %s1325
          %s1327 = sshll.u32 %s1300, 4
          %s1328 = int_to_ptr.vmem [resolvable:$true] %s1327
          %s1329 = sshll.u32 %s1326, 4
          %s1330 = int_to_ptr.hbm [resolvable:$true] %s1329
          %1335 = dma.vmem_to_hbm [thread:$0]  %s1328, 512, %s1330, %s1297, 128, 128, 8
        $region40: #{tpu_custom_call.1} parent=35 // pred_fallthru
          _
        // Predicated region
        $region41: #{tpu_custom_call.1} parent=35 // pred_check
          %p1336 = pneg %p172
        $region42: #{tpu_custom_call.1} parent=35 // pred_check_branch
          %1338 = sbr.rel (%p1336) target = $region44
        $region43: #{tpu_custom_call.1} parent=35 // pred_region
          _
        $region44: #{tpu_custom_call.1} parent=35 // pred_fallthru
          _
        // Predicated region
        $region45: #{tpu_custom_call.1} parent=35 // pred_check
          %p1339 = pneg %p200
        $region46: #{tpu_custom_call.1} parent=35 // pred_check_branch
          %1341 = sbr.rel (%p1339) target = $region48
        $region47: #{tpu_custom_call.1} parent=35 // pred_region
          _
        $region48: #{tpu_custom_call.1} parent=35 // pred_fallthru
          _
      $region36: #{tpu_custom_call.1} parent=5 // pred_fallthru
        _
      %p1342 = scmp.le.s32.totalorder 2, %s16
      // Predicated region
      $region49: #{tpu_custom_call.1} parent=5 // pred_check
        %p1343 = pneg %p1342
      $region50: #{tpu_custom_call.1} parent=5 // pred_check_branch
        %1345 = sbr.rel (%p1343) target = $region52
      $region51: #{tpu_custom_call.1} parent=5 // pred_region
        %s1346 = ssub.s32 %s16, 2
        // Predicated region
        $region53: #{tpu_custom_call.1} parent=51 // pred_check
          %p1347 = pneg %p150
        $region54: #{tpu_custom_call.1} parent=51 // pred_check_branch
          %1349 = sbr.rel (%p1347) target = $region56
        $region55: #{tpu_custom_call.1} parent=51 // pred_region
          %s1350 = sand.u32 %s135, 1
          %s1351 = scalar_lea.sflag [#allocation3], %s1350
          %s1352 = sand.u32 %s135, 1
          %s1353 = smul.addr %s1352, 32
          %s1354 = scalar_lea.vmem [#allocation2], %s1353
          %1356 = dma.done %s1351, 512
        $region56: #{tpu_custom_call.1} parent=51 // pred_fallthru
          _
        // Predicated region
        $region57: #{tpu_custom_call.1} parent=51 // pred_check
          %p1357 = pneg %p178
        $region58: #{tpu_custom_call.1} parent=51 // pred_check_branch
          %1359 = sbr.rel (%p1357) target = $region60
        $region59: #{tpu_custom_call.1} parent=51 // pred_region
          %p1360 = scmp.lt.s32.totalorder %s27, 1
          %s1361 = scalar_select %p1360, %s27, 1
          %p1362 = scmp.lt.s32.totalorder %s28, 0
          %s1363 = scalar_select %p1362, %s28, 0
          %s1364 = smul.addr %s1363, 4
          %s1365 = smul.addr %s1361, 4
          %s1366 = sadd.s32 %s1364, %s1365
          %s1367 = scalar_lea.vmem %s5, %s1366
        $region60: #{tpu_custom_call.1} parent=51 // pred_fallthru
          _
        // Predicated region
        $region61: #{tpu_custom_call.1} parent=51 // pred_check
          %p1368 = pneg %p206
        $region62: #{tpu_custom_call.1} parent=51 // pred_check_branch
          %1370 = sbr.rel (%p1368) target = $region64
        $region63: #{tpu_custom_call.1} parent=51 // pred_region
          %p1371 = scmp.lt.s32.totalorder %s27, 1
          %s1372 = scalar_select %p1371, %s27, 1
          %p1373 = scmp.lt.s32.totalorder %s28, 0
          %s1374 = scalar_select %p1373, %s28, 0
          %s1375 = smul.addr %s1374, 8
          %s1376 = smul.addr %s1372, 8
          %s1377 = sadd.s32 %s1375, %s1376
          %s1378 = smul.addr %s1377, 8
          %s1379 = scalar_lea.vmem %s6, %s1378
        $region64: #{tpu_custom_call.1} parent=51 // pred_fallthru
          _
      $region52: #{tpu_custom_call.1} parent=5 // pred_fallthru
        _
    $region6: #{tpu_custom_call.1} parent=1 // loop_footer
      %s20 = sadd.s32 1, %s16
    $region7: #{tpu_custom_call.1} parent=1 // loop_footer_branch
      %15 = sbr.rel target = $region3
    $region8: #{tpu_custom_call.1} parent=1 // loop_exit
      _
    %1380 = vsyncpa [#allocation3], 1
    %s1381 = scalar_lea.sflag [#allocation3], 1
    %1382 = vsyncpa %s1381, 1

</llo_original>
